<compile_context>
chip_gen: v7x
topology: tpu7x:2x2x1
jax: 0.10.0
libtpu: 0.0.40
codegen_flags: <defaults>
</compile_context>

<pallas_src>
import functools

import jax
import jax.numpy as jnp
from jax.experimental import pallas as pl
from jax.experimental.pallas import tpu as pltpu

LANE = 128


def _round_up(x, m):
    return (x + m - 1) // m * m


def _vmem_capacity_bytes():
    try:
        return int(pltpu.get_tpu_info().vmem_capacity_bytes)
    except Exception:
        return 64 * 1024 * 1024   # conservative default = v7x per-TC VMEM


# ---------------------------------------------------------------------------
# Pallas kernels
# ---------------------------------------------------------------------------
def _patch_matmul(x_ref, w_ref, *, stride, th, Wo):
    """Single big-K matmul producing `th` output rows of a 3x3 conv.

    x_ref: (1, stride*stride, Hh, Wh, Cp) bf16 phase-decomposed padded plane
           (whole plane; resident across the co/ho grid axes).
    w_ref: (9*Cp, tile_co) bf16, tap-major / channel-minor along K.
    Returns an f32 (th*Wo, tile_co) block for output rows [ho*th, ho*th+th).
    """
    cp = x_ref.shape[-1]
    # ho is the innermost grid axis (axis 2 of grid=(n_co, N, n_ho)).
    r0 = pl.multiple_of(pl.program_id(2) * th, th)
    taps = []
    for i in range(3):
        for j in range(3):
            phase = (i % stride) * stride + (j % stride)
            oi, oj = i // stride, j // stride
            taps.append(x_ref[0, phase, pl.ds(r0 + oi, th), oj:oj + Wo, :])
    patch = jnp.concatenate(taps, axis=-1).reshape(th * Wo, 9 * cp)
    return jnp.dot(patch, w_ref[...], preferred_element_type=jnp.float32)


def _conv_kernel(x_ref, w_ref, b_ref, o_ref, *, stride, th, Wo, relu):
    acc = _patch_matmul(x_ref, w_ref, stride=stride, th=th, Wo=Wo)
    acc = acc + b_ref[...]
    if relu:
        acc = jnp.maximum(acc, 0.0)
    o_ref[0] = acc.astype(o_ref.dtype)


def _conv_shortcut_conv_kernel(x_ref, w_ref, b_ref, xs_ref, ws_ref, o_ref, *,
                               stride, th, Wo):
    acc = _patch_matmul(x_ref, w_ref, stride=stride, th=th, Wo=Wo)
    # fused 1x1-conv + BN shortcut branch: one extra matmul on the same acc
    acc = acc + jnp.dot(xs_ref[0], ws_ref[...], preferred_element_type=jnp.float32)
    acc = acc + b_ref[...]
    acc = jnp.maximum(acc, 0.0)
    o_ref[0] = acc.astype(o_ref.dtype)


def _conv_shortcut_id_kernel(x_ref, w_ref, b_ref, xs_ref, o_ref, *,
                             stride, th, Wo):
    acc = _patch_matmul(x_ref, w_ref, stride=stride, th=th, Wo=Wo)
    # identity residual: elementwise VPU add (no eye-matmul)
    acc = acc + xs_ref[0].astype(jnp.float32)
    acc = acc + b_ref[...]
    acc = jnp.maximum(acc, 0.0)
    o_ref[0] = acc.astype(o_ref.dtype)


# ---------------------------------------------------------------------------
# pallas_call wrapper
# ---------------------------------------------------------------------------
def _pick_row_tile(Ho, Wo, Cp, tile_co, vmem_cap):
    """Largest Ho-divisor row tile whose per-step working set fits the budget.

    Only tiles keeping the flattened (th*Wo) block dim (8,128)-aligned (or the
    full Ho) are considered so stores stay unmasked.
    """
    budget = max(vmem_cap // 16, 1 << 20)

    def chunk_bytes(d):
        rows = d * Wo
        patch = rows * 9 * Cp * 2 * 2        # bf16 patch slab (+ relayout copy)
        acc = rows * tile_co * 4             # f32 accumulator
        out = rows * tile_co * 4 * 2         # double-buffered output block
        return patch + acc + out

    candidates = [d for d in range(1, Ho + 1)
                  if Ho % d == 0 and ((d * Wo) % 8 == 0 or d == Ho)]
    fitting = [d for d in candidates if chunk_bytes(d) <= budget]
    return max(fitting) if fitting else min(candidates)


def conv3x3_bn_act(x_ph, w_flat, bias, *, stride, Ho, Wo, relu, out_dtype,
                   shortcut=None, row_tile=None):
    """Fused 3x3 conv + folded BN (+ fused shortcut add) (+ ReLU).

    x_ph:    (N, stride*stride, Hh, Wh, Cp) bf16 phase-decomposed padded input.
    w_flat:  (9*Cp, Coutp) bf16 with BN scale folded in.
    bias:    (1, Coutp) f32.
    shortcut: None
              | ("conv", xs (N, P, Cinp) bf16, ws (Cinp, Coutp) bf16)
              | ("identity", xs (N, P, Coutp) bf16)
    Returns (N, Ho*Wo, Coutp) of out_dtype.
    """
    N, n_phase, Hh, Wh, Cp = x_ph.shape
    K, Coutp = w_flat.shape
    assert K == 9 * Cp
    P = Ho * Wo
    vmem_cap = _vmem_capacity_bytes()

    # Keep the whole weight resident when small (avoids per-batch re-streaming);
    # otherwise tile cout 256/128 and place it OUTERMOST in the grid.
    if K * Coutp * 2 <= 4 * 1024 * 1024:
        tile_co = Coutp
    elif Coutp % 256 == 0:
        tile_co = 256
    else:
        tile_co = LANE
    n_co = Coutp // tile_co

    th = row_tile if row_tile is not None else _pick_row_tile(Ho, Wo, Cp,
                                                              tile_co, vmem_cap)
    assert Ho % th == 0, (Ho, th)
    n_ho = Ho // th
    P_blk = th * Wo

    x_spec = pl.BlockSpec((1, n_phase, Hh, Wh, Cp),
                          lambda co, b, ho: (b, 0, 0, 0, 0))
    w_spec = pl.BlockSpec((K, tile_co), lambda co, b, ho: (0, co))
    b_spec = pl.BlockSpec((1, tile_co), lambda co, b, ho: (0, co))
    out_spec = pl.BlockSpec((1, P_blk, tile_co), lambda co, b, ho: (b, ho, co))

    if shortcut is None:
        kernel = functools.partial(_conv_kernel, stride=stride, th=th, Wo=Wo,
                                   relu=relu)
        in_specs = [x_spec, w_spec, b_spec]
        operands = (x_ph, w_flat, bias)
    elif shortcut[0] == "conv":
        _, xs, ws = shortcut
        Csp = xs.shape[-1]
        xs_spec = pl.BlockSpec((1, P_blk, Csp), lambda co, b, ho: (b, ho, 0))
        ws_spec = pl.BlockSpec((Csp, tile_co), lambda co, b, ho: (0, co))
        kernel = functools.partial(_conv_shortcut_conv_kernel, stride=stride,
                                   th=th, Wo=Wo)
        in_specs = [x_spec, w_spec, b_spec, xs_spec, ws_spec]
        operands = (x_ph, w_flat, bias, xs, ws)
    else:  # identity shortcut
        _, xs = shortcut
        xs_spec = pl.BlockSpec((1, P_blk, tile_co), lambda co, b, ho: (b, ho, co))
        kernel = functools.partial(_conv_shortcut_id_kernel, stride=stride,
                                   th=th, Wo=Wo)
        in_specs = [x_spec, w_spec, b_spec, xs_spec]
        operands = (x_ph, w_flat, bias, xs)

    return pl.pallas_call(
        kernel,
        out_shape=jax.ShapeDtypeStruct((N, P, Coutp), out_dtype),
        grid=(n_co, N, n_ho),
        in_specs=in_specs,
        out_specs=out_spec,
        compiler_params=pltpu.CompilerParams(
            dimension_semantics=("parallel", "parallel", "parallel"),
            vmem_limit_bytes=min(vmem_cap // 2, 96 * 1024 * 1024)),
    )(*operands)


# ---------------------------------------------------------------------------
# JAX-side glue: padding, phase decomposition, BN folding, weight prep
# ---------------------------------------------------------------------------
def _pad_axis(a, axis, target):
    if a.shape[axis] >= target:
        return a
    pads = [(0, 0)] * a.ndim
    pads[axis] = (0, target - a.shape[axis])
    return jnp.pad(a, pads)


def _phase_decompose(x_nhwc, stride, Ho, Wo):
    """Pad (top/left = 1 for the 3x3 / pad=1 conv) and split into stride*stride
    spatial phases so the kernel only needs unit-stride slices.  Output:
    (N, stride*stride, Hp//stride, Wp//stride, C); total size ~= input."""
    N, H, W, C = x_nhwc.shape
    Hp = _round_up(stride * (Ho - 1) + 3, stride)
    Wp = _round_up(stride * (Wo - 1) + 3, stride)
    x_p = jnp.pad(x_nhwc, ((0, 0), (1, Hp - H - 1), (1, Wp - W - 1), (0, 0)))
    x_p = x_p.reshape(N, Hp // stride, stride, Wp // stride, stride, C)
    x_p = jnp.transpose(x_p, (0, 2, 4, 1, 3, 5))
    return x_p.reshape(N, stride * stride, Hp // stride, Wp // stride, C)


def fold_bn(gamma, beta, mean, var, eps=1e-5):
    scale = gamma / jnp.sqrt(var + eps)
    bias = beta - mean * scale
    return scale, bias


def _prep_conv_weight(w, scale, cin_pad, cout_pad):
    """(kh,kw,Cin,Cout) f32 -> (kh*kw*cin_pad, cout_pad) bf16, BN scale folded,
    tap-major / channel-minor K ordering (matches the in-kernel patch slab)."""
    kh, kw, cin, cout = w.shape
    w = w * scale[None, None, None, :]
    w = w.reshape(kh * kw, cin, cout)
    w = _pad_axis(_pad_axis(w, 1, cin_pad), 2, cout_pad)
    return w.reshape(kh * kw * cin_pad, cout_pad).astype(jnp.bfloat16)


def init_basic_block_params(key, in_planes, planes, stride):
    """Deterministic synthetic parameters matching BasicBlock.__init__ shapes."""
    ks = jax.random.split(key, 12)
    p = {}
    p["w1"] = jax.random.normal(ks[0], (3, 3, in_planes, planes), jnp.float32) * 0.1
    p["w2"] = jax.random.normal(ks[1], (3, 3, planes, planes), jnp.float32) * 0.1

    def bn_params(k0, k1, k2, k3, c):
        gamma = 0.5 + jax.random.uniform(k0, (c,), jnp.float32)
        beta = jax.random.normal(k1, (c,), jnp.float32) * 0.1
        mean = jax.random.normal(k2, (c,), jnp.float32) * 0.1
        var = 0.5 + jax.random.uniform(k3, (c,), jnp.float32)
        return gamma, beta, mean, var

    p["bn1"] = bn_params(ks[2], ks[3], ks[4], ks[5], planes)
    p["bn2"] = bn_params(ks[6], ks[7], ks[8], ks[9], planes)

    p["has_shortcut_conv"] = (stride != 1) or (in_planes != planes)
    if p["has_shortcut_conv"]:
        p["ws"] = jax.random.normal(ks[10], (1, 1, in_planes, planes), jnp.float32) * 0.1
        kk = jax.random.split(ks[11], 4)
        p["bns"] = bn_params(kk[0], kk[1], kk[2], kk[3], planes)
    return p


# ---------------------------------------------------------------------------
# BasicBlock forward (NCHW in / NCHW out)
# ---------------------------------------------------------------------------
def basic_block_forward(x_nchw, params, stride, *, row_tile=None,
                        out_dtype=jnp.float32):
    # bf16 BEFORE the layout transpose: halves that HBM pass. (matmul path is
    # bf16 operands / f32 accumulation — slightly looser than the f32 PyTorch
    # reference by design.)
    x = jnp.transpose(x_nchw.astype(jnp.bfloat16), (0, 2, 3, 1))       # NHWC
    N, H, W, Cin = x.shape
    planes = params["w1"].shape[-1]
    Cinp = _round_up(Cin, LANE)
    Cmidp = _round_up(planes, LANE)
    Ho = (H - 1) // stride + 1
    Wo = (W - 1) // stride + 1

    s1, b1 = fold_bn(*params["bn1"])
    s2, b2 = fold_bn(*params["bn2"])

    # ---- conv1 (3x3, stride) + bn1 + relu : one fused pallas_call ----
    x_cp = _pad_axis(x, 3, Cinp)
    x_ph = _phase_decompose(x_cp, stride, Ho, Wo)
    w1 = _prep_conv_weight(params["w1"], s1, Cinp, Cmidp)
    b1p = _pad_axis(b1.reshape(1, -1), 1, Cmidp).astype(jnp.float32)
    out1 = conv3x3_bn_act(x_ph, w1, b1p, stride=stride, Ho=Ho, Wo=Wo,
                          relu=True, out_dtype=jnp.bfloat16,
                          row_tile=row_tile)                 # (N, Ho*Wo, Cmidp)

    # ---- shortcut operands (fused into the conv2 kernel) ----
    if params["has_shortcut_conv"]:
        ss, bs = fold_bn(*params["bns"])
        xs = x_cp[:, ::stride, ::stride, :].reshape(N, Ho * Wo, Cinp)
        ws = _prep_conv_weight(params["ws"], ss, Cinp, Cmidp)   # (Cinp, Cmidp)
        b_sc = _pad_axis(bs.reshape(1, -1), 1, Cmidp).astype(jnp.float32)
        shortcut = ("conv", xs, ws)
    else:
        # identity: elementwise add in the epilogue (no eye-matmul, no extra DMA
        # of an eye weight); stride == 1 and Cinp == Cmidp in this branch.
        assert stride == 1 and Cinp == Cmidp
        xs = x_cp.reshape(N, H * W, Cinp)
        b_sc = jnp.zeros((1, Cmidp), jnp.float32)
        shortcut = ("identity", xs)

    # ---- conv2 (3x3, stride 1) + bn2 + shortcut add + relu : one fused call --
    # TODO(synk): fuse conv1+conv2 in one pallas_call (halo'd mid activation in
    # VMEM) to remove this bf16 HBM round trip + pad.
    out1_img = out1.reshape(N, Ho, Wo, Cmidp)
    o_ph = _phase_decompose(out1_img, 1, Ho, Wo)
    w2 = _prep_conv_weight(params["w2"], s2, Cmidp, Cmidp)
    b2p = (_pad_axis(b2.reshape(1, -1), 1, Cmidp) + b_sc).astype(jnp.float32)
    out = conv3x3_bn_act(o_ph, w2, b2p, stride=1, Ho=Ho, Wo=Wo, relu=True,
                         out_dtype=out_dtype, shortcut=shortcut,
                         row_tile=row_tile)                  # (N, Ho*Wo, Cmidp)

    out = out[:, :, :planes].reshape(N, Ho, Wo, planes)
    return jnp.transpose(out, (0, 3, 1, 2)).astype(jnp.float32)        # NCHW


# ---------------------------------------------------------------------------
# Pure-JAX reference (mirrors the PyTorch module, eval-mode BN) for validation
# ---------------------------------------------------------------------------
def reference_forward(x_nchw, params, stride):
    def conv(x, w_khwcio, s, pad):
        w_oihw = jnp.transpose(w_khwcio, (3, 2, 0, 1))
        return jax.lax.conv_general_dilated(
            x, w_oihw, (s, s), ((pad, pad), (pad, pad)),
            dimension_numbers=("NCHW", "OIHW", "NCHW"))

    def bn(x, bn_params):
        scale, bias = fold_bn(*bn_params)
        return x * scale[None, :, None, None] + bias[None, :, None, None]

    out = jax.nn.relu(bn(conv(x_nchw, params["w1"], stride, 1), params["bn1"]))
    out = bn(conv(out, params["w2"], 1, 1), params["bn2"])
    if params["has_shortcut_conv"]:
        sc = bn(conv(x_nchw, params["ws"], stride, 0), params["bns"])
    else:
        sc = x_nchw
    return jax.nn.relu(out + sc)


if __name__ == "__main__":
    key = jax.random.PRNGKey(0)

    def run_case(case_key, *, N, in_planes, planes, H, W, stride, row_tile):
        k_x, k_p = jax.random.split(case_key)
        x = jax.random.uniform(k_x, (N, in_planes, H, W), jnp.float32)
        params = init_basic_block_params(k_p, in_planes, planes, stride)
        out = jax.block_until_ready(
            basic_block_forward(x, params, stride, row_tile=row_tile))
        ref = jax.block_until_ready(reference_forward(x, params, stride))
        Ho = (H - 1) // stride + 1
        Wo = (W - 1) // stride + 1
        assert out.shape == ref.shape == (N, planes, Ho, Wo)
        err = float(jnp.max(jnp.abs(out - ref)))
        # bf16 matmul operands / bf16 residual (f32 accumulation) vs f32 ref
        assert jnp.allclose(out, ref, atol=5e-2, rtol=5e-2), err
        return err

    k1, k2 = jax.random.split(key)
    # Case 1: stride-2, channel-changing block -> fused 1x1-conv+BN shortcut.
    run_case(k1, N=2, in_planes=4, planes=8, H=16, W=16, stride=2,
             row_tile=None)
    # Case 2: stride-1 identity-shortcut block; row_tile forced small so the
    # multi-chunk output-row grid axis (dynamic row offsets) is exercised.
    run_case(k2, N=2, in_planes=8, planes=8, H=16, W=16, stride=1, row_tile=4)

    print("KERNEL_OK")
</pallas_src>

<mosaic_0001>
module attributes {stable_mosaic.version = 11 : i64} {
  func.func @_conv_kernel(%arg0: i32, %arg1: i32, %arg2: i32, %arg3: memref<1x4x9x9x128xbf16, #tpu.memory_space<vmem>>, %arg4: memref<1152x128xbf16, #tpu.memory_space<vmem>>, %arg5: memref<1x128xf32, #tpu.memory_space<vmem>>, %arg6: memref<1x64x128xbf16, #tpu.memory_space<vmem>>) attributes {dimension_semantics = [#tpu.dimension_semantics<parallel>, #tpu.dimension_semantics<parallel>, #tpu.dimension_semantics<parallel>], iteration_bounds = array<i64: 1, 2, 1>, scalar_prefetch = 0 : i64, scratch_operands = 0 : i64, tpu.core_type = #tpu.core_type<tc>, window_params = [{transform_indices = @transform_0, window_bounds = array<i64: 1, 4, 9, 9, 128>}, {transform_indices = @transform_1, window_bounds = array<i64: 1152, 128>}, {transform_indices = @transform_2, window_bounds = array<i64: 1, 128>}, {transform_indices = @transform_3, window_bounds = array<i64: 1, 64, 128>}]} {
    %c8_i32 = arith.constant 8 : i32
    %0 = arith.muli %arg2, %c8_i32 : i32
    %1 = tpu.assume_multiple %0, 8 : i32
    %c0_i32 = arith.constant 0 : i32
    %2 = arith.addi %1, %c0_i32 : i32
    %c0 = arith.constant 0 : index
    %c0_0 = arith.constant 0 : index
    %3 = arith.index_cast %2 : i32 to index
    %c0_1 = arith.constant 0 : index
    %c0_2 = arith.constant 0 : index
    %4 = vector.load %arg3[%c0, %c0_0, %3, %c0_1, %c0_2] : memref<1x4x9x9x128xbf16, #tpu.memory_space<vmem>>, vector<1x1x8x8x128xbf16>
    %5 = vector.shape_cast %4 : vector<1x1x8x8x128xbf16> to vector<8x8x128xbf16>
    %c0_i32_3 = arith.constant 0 : i32
    %6 = arith.addi %1, %c0_i32_3 : i32
    %c0_4 = arith.constant 0 : index
    %c1 = arith.constant 1 : index
    %7 = arith.index_cast %6 : i32 to index
    %c0_5 = arith.constant 0 : index
    %c0_6 = arith.constant 0 : index
    %8 = vector.load %arg3[%c0_4, %c1, %7, %c0_5, %c0_6] : memref<1x4x9x9x128xbf16, #tpu.memory_space<vmem>>, vector<1x1x8x8x128xbf16>
    %9 = vector.shape_cast %8 : vector<1x1x8x8x128xbf16> to vector<8x8x128xbf16>
    %c0_i32_7 = arith.constant 0 : i32
    %10 = arith.addi %1, %c0_i32_7 : i32
    %c0_8 = arith.constant 0 : index
    %c0_9 = arith.constant 0 : index
    %11 = arith.index_cast %10 : i32 to index
    %c1_10 = arith.constant 1 : index
    %c0_11 = arith.constant 0 : index
    %12 = vector.load %arg3[%c0_8, %c0_9, %11, %c1_10, %c0_11] : memref<1x4x9x9x128xbf16, #tpu.memory_space<vmem>>, vector<1x1x8x8x128xbf16>
    %13 = vector.shape_cast %12 : vector<1x1x8x8x128xbf16> to vector<8x8x128xbf16>
    %c0_i32_12 = arith.constant 0 : i32
    %14 = arith.addi %1, %c0_i32_12 : i32
    %c0_13 = arith.constant 0 : index
    %c2 = arith.constant 2 : index
    %15 = arith.index_cast %14 : i32 to index
    %c0_14 = arith.constant 0 : index
    %c0_15 = arith.constant 0 : index
    %16 = vector.load %arg3[%c0_13, %c2, %15, %c0_14, %c0_15] : memref<1x4x9x9x128xbf16, #tpu.memory_space<vmem>>, vector<1x1x8x8x128xbf16>
    %17 = vector.shape_cast %16 : vector<1x1x8x8x128xbf16> to vector<8x8x128xbf16>
    %c0_i32_16 = arith.constant 0 : i32
    %18 = arith.addi %1, %c0_i32_16 : i32
    %c0_17 = arith.constant 0 : index
    %c3 = arith.constant 3 : index
    %19 = arith.index_cast %18 : i32 to index
    %c0_18 = arith.constant 0 : index
    %c0_19 = arith.constant 0 : index
    %20 = vector.load %arg3[%c0_17, %c3, %19, %c0_18, %c0_19] : memref<1x4x9x9x128xbf16, #tpu.memory_space<vmem>>, vector<1x1x8x8x128xbf16>
    %21 = vector.shape_cast %20 : vector<1x1x8x8x128xbf16> to vector<8x8x128xbf16>
    %c0_i32_20 = arith.constant 0 : i32
    %22 = arith.addi %1, %c0_i32_20 : i32
    %c0_21 = arith.constant 0 : index
    %c2_22 = arith.constant 2 : index
    %23 = arith.index_cast %22 : i32 to index
    %c1_23 = arith.constant 1 : index
    %c0_24 = arith.constant 0 : index
    %24 = vector.load %arg3[%c0_21, %c2_22, %23, %c1_23, %c0_24] : memref<1x4x9x9x128xbf16, #tpu.memory_space<vmem>>, vector<1x1x8x8x128xbf16>
    %25 = vector.shape_cast %24 : vector<1x1x8x8x128xbf16> to vector<8x8x128xbf16>
    %c1_i32 = arith.constant 1 : i32
    %26 = arith.addi %1, %c1_i32 : i32
    %c0_25 = arith.constant 0 : index
    %c0_26 = arith.constant 0 : index
    %27 = arith.index_cast %26 : i32 to index
    %c0_27 = arith.constant 0 : index
    %c0_28 = arith.constant 0 : index
    %28 = vector.load %arg3[%c0_25, %c0_26, %27, %c0_27, %c0_28] : memref<1x4x9x9x128xbf16, #tpu.memory_space<vmem>>, vector<1x1x8x8x128xbf16>
    %29 = vector.shape_cast %28 : vector<1x1x8x8x128xbf16> to vector<8x8x128xbf16>
    %c1_i32_29 = arith.constant 1 : i32
    %30 = arith.addi %1, %c1_i32_29 : i32
    %c0_30 = arith.constant 0 : index
    %c1_31 = arith.constant 1 : index
    %31 = arith.index_cast %30 : i32 to index
    %c0_32 = arith.constant 0 : index
    %c0_33 = arith.constant 0 : index
    %32 = vector.load %arg3[%c0_30, %c1_31, %31, %c0_32, %c0_33] : memref<1x4x9x9x128xbf16, #tpu.memory_space<vmem>>, vector<1x1x8x8x128xbf16>
    %33 = vector.shape_cast %32 : vector<1x1x8x8x128xbf16> to vector<8x8x128xbf16>
    %c1_i32_34 = arith.constant 1 : i32
    %34 = arith.addi %1, %c1_i32_34 : i32
    %c0_35 = arith.constant 0 : index
    %c0_36 = arith.constant 0 : index
    %35 = arith.index_cast %34 : i32 to index
    %c1_37 = arith.constant 1 : index
    %c0_38 = arith.constant 0 : index
    %36 = vector.load %arg3[%c0_35, %c0_36, %35, %c1_37, %c0_38] : memref<1x4x9x9x128xbf16, #tpu.memory_space<vmem>>, vector<1x1x8x8x128xbf16>
    %37 = vector.shape_cast %36 : vector<1x1x8x8x128xbf16> to vector<8x8x128xbf16>
    %38 = tpu.concatenate %5, %9, %13, %17, %21, %25, %29, %33, %37 in 2 : vector<8x8x128xbf16>, vector<8x8x128xbf16>, vector<8x8x128xbf16>, vector<8x8x128xbf16>, vector<8x8x128xbf16>, vector<8x8x128xbf16>, vector<8x8x128xbf16>, vector<8x8x128xbf16>, vector<8x8x128xbf16> -> vector<8x8x1152xbf16>
    %39 = vector.shape_cast %38 : vector<8x8x1152xbf16> to vector<64x1152xbf16>
    %c0_39 = arith.constant 0 : index
    %c0_40 = arith.constant 0 : index
    %40 = vector.load %arg4[%c0_39, %c0_40] : memref<1152x128xbf16, #tpu.memory_space<vmem>>, vector<1152x128xbf16>
    %cst = arith.constant dense<0.000000e+00> : vector<64x128xf32>
    %41 = tpu.matmul %39, %40, %cst {dimension_numbers = #tpu.dot_dimension_numbers<[1], [0], [0], [1], [0, 0, 1, 1], [], []>} : vector<64x1152xbf16>, vector<1152x128xbf16>, vector<64x128xf32> -> vector<64x128xf32>
    %c0_41 = arith.constant 0 : index
    %c0_42 = arith.constant 0 : index
    %42 = vector.load %arg5[%c0_41, %c0_42] : memref<1x128xf32, #tpu.memory_space<vmem>>, vector<1x128xf32>
    %43 = vector.broadcast %42 : vector<1x128xf32> to vector<64x128xf32>
    %44 = arith.addf %41, %43 : vector<64x128xf32>
    %cst_43 = arith.constant 0.000000e+00 : f32
    %45 = vector.broadcast %cst_43 : f32 to vector<64x128xf32>
    %46 = arith.maximumf %44, %45 : vector<64x128xf32>
    %47 = arith.truncf %46 : vector<64x128xf32> to vector<64x128xbf16>
    %c0_44 = arith.constant 0 : index
    %c0_45 = arith.constant 0 : index
    %c0_46 = arith.constant 0 : index
    %48 = vector.load %arg6[%c0_44, %c0_45, %c0_46] : memref<1x64x128xbf16, #tpu.memory_space<vmem>>, vector<1x64x128xbf16>
    %49 = vector.shape_cast %48 : vector<1x64x128xbf16> to vector<64x128xbf16>
    %50 = vector.shape_cast %47 : vector<64x128xbf16> to vector<1x64x128xbf16>
    tpu.vector_store %arg6[%c0_44, %c0_45, %c0_46], %50 {strides = array<i32>} : memref<1x64x128xbf16, #tpu.memory_space<vmem>>, vector<1x64x128xbf16>,
    return
  }
  func.func @transform_0(%arg0: i32, %arg1: i32, %arg2: i32) -> (i32, i32, i32, i32, i32) {
    %c0_i32 = arith.constant 0 : i32
    %c0_i32_0 = arith.constant 0 : i32
    %c0_i32_1 = arith.constant 0 : i32
    %c0_i32_2 = arith.constant 0 : i32
    %c0_i32_3 = arith.constant 0 : i32
    return %arg1, %c0_i32, %c0_i32_0, %c0_i32_1, %c0_i32_2 : i32, i32, i32, i32, i32
  }
  func.func @transform_1(%arg0: i32, %arg1: i32, %arg2: i32) -> (i32, i32) {
    %c0_i32 = arith.constant 0 : i32
    %c0_i32_0 = arith.constant 0 : i32
    return %c0_i32, %arg0 : i32, i32
  }
  func.func @transform_2(%arg0: i32, %arg1: i32, %arg2: i32) -> (i32, i32) {
    %c0_i32 = arith.constant 0 : i32
    %c0_i32_0 = arith.constant 0 : i32
    return %c0_i32, %arg0 : i32, i32
  }
  func.func @transform_3(%arg0: i32, %arg1: i32, %arg2: i32) -> (i32, i32, i32) {
    %c0_i32 = arith.constant 0 : i32
    return %arg1, %arg2, %arg0 : i32, i32, i32
  }
}

</mosaic_0001>

<llo_original>
// kernel: tpu_custom_call.1
$region0: #{tpu_custom_call.1}
  #allocation0 [shape = 'u32[]', space=smem, size = 0x4, offset = 0x4, fixed_abs, tag = 'smem constant byte address 0x4 - core index']
  #allocation1 [shape = 'u32[144,128]{1,0:T(1,128)}', space=vmem, size = 0x12000, scoped, tag = 'internal scratch']
  %s0 = inlined_call_operand.vmem [shape: bf16[2,4,9,9,128], index: 0, kind: input, shape index: {}]
  %s1 = inlined_call_operand.vmem [shape: bf16[1152,128], index: 1, kind: input, shape index: {}]
  %s2 = inlined_call_operand.vmem [shape: f32[1,128], index: 2, kind: input, shape index: {}]
  %s3 = inlined_call_operand.hbm [shape: bf16[2,64,128], index: 3, kind: output, shape index: {}]
  %s4 = sld [smem:[#allocation0]]
  $region45: #{tpu_custom_call.1} parent=0
    _
  %s6 = ssub.s32 1, %s4
  %s7 = scalar_select 0, %s6, %s4
  $region1: #{tpu_custom_call.1} parent=0
    #allocation2 [shape = 'u8[32768]{0}', space=vmem, size = 0x8000, scoped, tag = 'output window, operand 0']
    #allocation3 [shape = 's32[2]{0}', space=sflag, size = 0x8, scoped, tag = 'scoped memory for tpu_custom_call.1']
    %8 = vsyncpa [#allocation3], 0
    %s9 = scalar_lea.sflag [#allocation3], 1
    %10 = vsyncpa %s9, 0
    loop: start=0, step=1, limit=4
    $region2: #{tpu_custom_call.1} parent=1 // loop_pre_header
      _
    $region3: #{tpu_custom_call.1} parent=1 // loop_header
      %s12 = sphi 0, %s16
      %p13 = scmp.ge.s32.totalorder %s12, 4
      %s19 = sphi 0, %s38
      %s20 = sphi 0, %s34
      %s21 = sphi 0, %s30
      %s22 = sphi 0, %s19
      %s23 = sphi 0, %s20
      %s24 = sphi 0, %s21
      %s25 = sphi 0, %s22
      %s26 = sphi 0, %s23
      %s27 = sphi 0, %s24
      %s41 = sphi 0, %s43
      %s44 = sphi 0, %s41
      %s45 = sphi 0, %s44
      %s61 = sphi 0, %s45
      %s67 = sphi 0, %s69
      %s70 = sphi 0, %s67
      %s71 = sphi 0, %s70
      %s87 = sphi 0, %s71
      %s93 = sphi 0, %s95
      %s96 = sphi 0, %s93
      %s97 = sphi 0, %s96
      %s113 = sphi 0, %s97
      %s123 = sphi 0, %s125
      %s126 = sphi 0, %s123
      %s127 = sphi 0, %s126
      %s143 = sphi 0, %s127
    $region4: #{tpu_custom_call.1} parent=1 // loop_header_branch
      %15 = sbr.rel (%p13) target = $region8
    $region5: #{tpu_custom_call.1} parent=1 // loop_body
      %s17 = ssub.s32 %s12, 1
      %s18 = ssub.s32 %s12, 2
      %s28 = sadd.s32 1, %s21
      %p29 = scmp.ge.s32.totalorder %s28, 1
      %s30 = scalar_select %p29, 0, %s28
      %s31 = sadd.s32 1, %s20
      %s32 = scalar_select %p29, %s31, %s20
      %p33 = scmp.ge.s32.totalorder %s32, 2
      %s34 = scalar_select %p33, 0, %s32
      %s35 = sadd.s32 1, %s19
      %s36 = scalar_select %p33, %s35, %s19
      %p37 = scmp.ge.s32.totalorder %s36, 1
      %s38 = scalar_select %p37, 0, %s36
      %s39 = ssub.s32 %s20, %s34
      %p40 = scmp.eq.s32.totalorder %s39, 0
      %s42 = sadd.s32 %s41, 1
      %s43 = scalar_select %p40, %s41, %s42
      %p46 = pneg %p40
      %p47 = scmp.eq.s32.totalorder %s12, 1
      %p48 = por %p46, %p47
      %p49 = scmp.ne.s32.totalorder %s41, %s44
      %p50 = scmp.eq.s32.totalorder %s12, 0
      %p51 = por %p49, %p50
      %p52 = scmp.ne.s32.totalorder %s41, %s44
      %p53 = scmp.eq.s32.totalorder %s17, 1
      %p54 = por %p52, %p53
      %p55 = scmp.ne.s32.totalorder %s44, %s45
      %p56 = scmp.eq.s32.totalorder %s17, 0
      %p57 = por %p55, %p56
      %p58 = scmp.ne.s32.totalorder %s44, %s45
      %p59 = scmp.eq.s32.totalorder %s18, 1
      %p60 = por %p58, %p59
      %p62 = scmp.ne.s32.totalorder %s45, %s61
      %p63 = scmp.eq.s32.totalorder %s18, 0
      %p64 = por %p62, %p63
      %s65 = ssub.s32 %s19, %s38
      %p66 = scmp.eq.s32.totalorder %s65, 0
      %s68 = sadd.s32 %s67, 1
      %s69 = scalar_select %p66, %s67, %s68
      %p72 = pneg %p66
      %p73 = scmp.eq.s32.totalorder %s12, 1
      %p74 = por %p72, %p73
      %p75 = scmp.ne.s32.totalorder %s67, %s70
      %p76 = scmp.eq.s32.totalorder %s12, 0
      %p77 = por %p75, %p76
      %p78 = scmp.ne.s32.totalorder %s67, %s70
      %p79 = scmp.eq.s32.totalorder %s17, 1
      %p80 = por %p78, %p79
      %p81 = scmp.ne.s32.totalorder %s70, %s71
      %p82 = scmp.eq.s32.totalorder %s17, 0
      %p83 = por %p81, %p82
      %p84 = scmp.ne.s32.totalorder %s70, %s71
      %p85 = scmp.eq.s32.totalorder %s18, 1
      %p86 = por %p84, %p85
      %p88 = scmp.ne.s32.totalorder %s71, %s87
      %p89 = scmp.eq.s32.totalorder %s18, 0
      %p90 = por %p88, %p89
      %s91 = ssub.s32 %s19, %s38
      %p92 = scmp.eq.s32.totalorder %s91, 0
      %s94 = sadd.s32 %s93, 1
      %s95 = scalar_select %p92, %s93, %s94
      %p98 = pneg %p92
      %p99 = scmp.eq.s32.totalorder %s12, 1
      %p100 = por %p98, %p99
      %p101 = scmp.ne.s32.totalorder %s93, %s96
      %p102 = scmp.eq.s32.totalorder %s12, 0
      %p103 = por %p101, %p102
      %p104 = scmp.ne.s32.totalorder %s93, %s96
      %p105 = scmp.eq.s32.totalorder %s17, 1
      %p106 = por %p104, %p105
      %p107 = scmp.ne.s32.totalorder %s96, %s97
      %p108 = scmp.eq.s32.totalorder %s17, 0
      %p109 = por %p107, %p108
      %p110 = scmp.ne.s32.totalorder %s96, %s97
      %p111 = scmp.eq.s32.totalorder %s18, 1
      %p112 = por %p110, %p111
      %p114 = scmp.ne.s32.totalorder %s97, %s113
      %p115 = scmp.eq.s32.totalorder %s18, 0
      %p116 = por %p114, %p115
      %s117 = ssub.s32 %s20, %s34
      %s118 = ssub.s32 %s21, %s30
      %s119 = sor.u32 %s117, %s118
      %s120 = ssub.s32 %s19, %s38
      %s121 = sor.u32 %s119, %s120
      %p122 = scmp.eq.s32.totalorder %s121, 0
      %s124 = sadd.s32 %s123, 1
      %s125 = scalar_select %p122, %s123, %s124
      %p128 = pneg %p122
      %p129 = scmp.eq.s32.totalorder %s12, 1
      %p130 = por %p128, %p129
      %p131 = scmp.ne.s32.totalorder %s123, %s126
      %p132 = scmp.eq.s32.totalorder %s12, 0
      %p133 = por %p131, %p132
      %p134 = scmp.ne.s32.totalorder %s123, %s126
      %p135 = scmp.eq.s32.totalorder %s17, 1
      %p136 = por %p134, %p135
      %p137 = scmp.ne.s32.totalorder %s126, %s127
      %p138 = scmp.eq.s32.totalorder %s17, 0
      %p139 = por %p137, %p138
      %p140 = scmp.ne.s32.totalorder %s126, %s127
      %p141 = scmp.eq.s32.totalorder %s18, 1
      %p142 = por %p140, %p141
      %p144 = scmp.ne.s32.totalorder %s127, %s143
      %p145 = scmp.eq.s32.totalorder %s18, 0
      %p146 = por %p144, %p145
      %p147 = scmp.le.s32.totalorder 1, %s12
      %p148 = scmp.lt.s32.totalorder %s12, 3
      %p149 = pnand %p147, %p148
      %p150 = pneg %p149
      // Predicated region
      $region9: #{tpu_custom_call.1} parent=5 // pred_check
        _
      $region10: #{tpu_custom_call.1} parent=5 // pred_check_branch
        %152 = sbr.rel (%p149) target = $region12
      $region11: #{tpu_custom_call.1} parent=5 // pred_region
        %s153 = ssub.s32 %s12, 1
        // Predicated region
        $region13: #{tpu_custom_call.1} parent=11 // pred_check
          %p154 = pneg %p83
        $region14: #{tpu_custom_call.1} parent=11 // pred_check_branch
          %156 = sbr.rel (%p154) target = $region16
        $region15: #{tpu_custom_call.1} parent=11 // pred_region
          %p157 = scmp.lt.s32.totalorder %s22, 0
          %s158 = scalar_select %p157, %s22, 0
          %s159 = smul.addr %s158, 4
          %s160 = scalar_lea.vmem %s1, %s159
        $region16: #{tpu_custom_call.1} parent=11 // pred_fallthru
          _
        // Predicated region
        $region17: #{tpu_custom_call.1} parent=11 // pred_check
          %p161 = pneg %p109
        $region18: #{tpu_custom_call.1} parent=11 // pred_check_branch
          %163 = sbr.rel (%p161) target = $region20
        $region19: #{tpu_custom_call.1} parent=11 // pred_region
          %p164 = scmp.lt.s32.totalorder %s22, 0
          %s165 = scalar_select %p164, %s22, 0
          %s166 = scalar_lea.vmem %s2, %s165
        $region20: #{tpu_custom_call.1} parent=11 // pred_fallthru
          _
      $region12: #{tpu_custom_call.1} parent=5 // pred_fallthru
        _
      %p167 = scmp.lt.s32.totalorder %s12, 2
      // Predicated region
      $region21: #{tpu_custom_call.1} parent=5 // pred_check
        %p168 = pneg %p167
      $region22: #{tpu_custom_call.1} parent=5 // pred_check_branch
        %170 = sbr.rel (%p168) target = $region24
      $region23: #{tpu_custom_call.1} parent=5 // pred_region
        // Predicated region
        $region25: #{tpu_custom_call.1} parent=23 // pred_check
          %p171 = pneg %p51
        $region26: #{tpu_custom_call.1} parent=23 // pred_check_branch
          %173 = sbr.rel (%p171) target = $region28
        $region27: #{tpu_custom_call.1} parent=23 // pred_region
          %p174 = scmp.lt.s32.totalorder %s20, 1
          %s175 = scalar_select %p174, %s20, 1
          %s176 = smul.addr %s175, 72
          %s177 = smul.addr %s176, 4
          %s178 = scalar_lea.vmem %s0, %s177
        $region28: #{tpu_custom_call.1} parent=23 // pred_fallthru
          _
      $region24: #{tpu_custom_call.1} parent=5 // pred_fallthru
        _
      %p179 = scmp.le.s32.totalorder 1, %s12
      %p180 = scmp.lt.s32.totalorder %s12, 3
      %p181 = pnand %p179, %p180
      %p182 = pneg %p181
      // Predicated region
      $region29: #{tpu_custom_call.1} parent=5 // pred_check
        _
      $region30: #{tpu_custom_call.1} parent=5 // pred_check_branch
        %184 = sbr.rel (%p181) target = $region32
      $region31: #{tpu_custom_call.1} parent=5 // pred_region
        %s185 = ssub.s32 %s12, 1
        %p186 = scmp.lt.s32.totalorder %s23, 1
        %s187 = scalar_select %p186, %s23, 1
        %s188 = smul.addr %s187, 72
        %s189 = smul.addr %s188, 4
        %s190 = scalar_lea.vmem %s0, %s189
        %p191 = pneg %p57
        %p192 = pneg %p54
        %p193 = scmp.lt.s32.totalorder %s22, 0
        %s194 = scalar_select %p193, %s22, 0
        %s195 = smul.addr %s194, 4
        %s196 = scalar_lea.vmem %s1, %s195
        %p197 = pneg %p83
        %p198 = pneg %p80
        %p199 = scmp.lt.s32.totalorder %s22, 0
        %s200 = scalar_select %p199, %s22, 0
        %s201 = scalar_lea.vmem %s2, %s200
        %p202 = pneg %p109
        %p203 = pneg %p106
        %p204 = pneg %p139
        %p205 = pneg %p136
        %s206 = sand.u32 %s126, 1
        %s207 = scalar_lea.sflag [#allocation3], %s206
        %s208 = sand.u32 %s126, 1
        %s209 = smul.addr %s208, 32
        %s210 = scalar_lea.vmem [#allocation2], %s209
        %p211 = scmp.lt.s32.totalorder %s23, 1
        %s212 = scalar_select %p211, %s23, 1
        %s213 = smul.addr %s212, 72
        %s214 = smul.addr %s213, 4
        %s215 = scalar_lea.vmem %s0, %s214
        %p216 = scmp.lt.s32.totalorder %s22, 0
        %s217 = scalar_select %p216, %s22, 0
        %s218 = smul.addr %s217, 4
        %s219 = scalar_lea.vmem %s1, %s218
        %p220 = scmp.lt.s32.totalorder %s22, 0
        %s221 = scalar_select %p220, %s22, 0
        %s222 = scalar_lea.vmem %s2, %s221
        %s223 = smul.u32 8, %s24
        %s225 = smul.u32 %s24, 8
        %s226 = smul.u32 %s225, 2
        %s227 = smul.addr %s226, 4
        %s228 = scalar_lea.vmem %s215, %s227
        %v229 = vld [vmem:[%s228] sm:$0xf]
        %v230 = vld [vmem:[%s228 + $0x8] sm:$0xf]
        %v231 = vld [vmem:[%s228 + $0x10] sm:$0xf]
        %v232 = vld [vmem:[%s228 + $0x18] sm:$0xf]
        %v233 = vld [vmem:[%s228 + $0x20] sm:$0xf]
        %v234 = vld [vmem:[%s228 + $0x28] sm:$0xf]
        %v235 = vld [vmem:[%s228 + $0x30] sm:$0xf]
        %v236 = vld [vmem:[%s228 + $0x38] sm:$0xf]
        %s237 = sadd.s32 %s226, 18
        %s238 = smul.addr %s237, 4
        %s239 = scalar_lea.vmem %s215, %s238
        %v240 = vld [vmem:[%s239] sm:$0xf]
        %v241 = vld [vmem:[%s239 + $0x8] sm:$0xf]
        %v242 = vld [vmem:[%s239 + $0x10] sm:$0xf]
        %v243 = vld [vmem:[%s239 + $0x18] sm:$0xf]
        %v244 = vld [vmem:[%s239 + $0x20] sm:$0xf]
        %v245 = vld [vmem:[%s239 + $0x28] sm:$0xf]
        %v246 = vld [vmem:[%s239 + $0x30] sm:$0xf]
        %v247 = vld [vmem:[%s239 + $0x38] sm:$0xf]
        %v248 = vld [vmem:[%s228 + $0x4] sm:$0x1]
        %v249 = vld [vmem:[%s228 + $0xc] sm:$0x1]
        %v250 = vld [vmem:[%s228 + $0x14] sm:$0x1]
        %v251 = vld [vmem:[%s228 + $0x1c] sm:$0x1]
        %v252 = vld [vmem:[%s228 + $0x24] sm:$0x1]
        %v253 = vld [vmem:[%s228 + $0x2c] sm:$0x1]
        %v254 = vld [vmem:[%s228 + $0x34] sm:$0x1]
        %v255 = vld [vmem:[%s228 + $0x3c] sm:$0x1]
        %s256 = sadd.s32 %s226, 36
        %s257 = smul.addr %s256, 4
        %s258 = scalar_lea.vmem %s215, %s257
        %v259 = vld [vmem:[%s258] sm:$0xf]
        %v260 = vld [vmem:[%s258 + $0x8] sm:$0xf]
        %v261 = vld [vmem:[%s258 + $0x10] sm:$0xf]
        %v262 = vld [vmem:[%s258 + $0x18] sm:$0xf]
        %v263 = vld [vmem:[%s258 + $0x20] sm:$0xf]
        %v264 = vld [vmem:[%s258 + $0x28] sm:$0xf]
        %v265 = vld [vmem:[%s258 + $0x30] sm:$0xf]
        %v266 = vld [vmem:[%s258 + $0x38] sm:$0xf]
        %s267 = sadd.s32 %s226, 54
        %s268 = smul.addr %s267, 4
        %s269 = scalar_lea.vmem %s215, %s268
        %v270 = vld [vmem:[%s269] sm:$0xf]
        %v271 = vld [vmem:[%s269 + $0x8] sm:$0xf]
        %v272 = vld [vmem:[%s269 + $0x10] sm:$0xf]
        %v273 = vld [vmem:[%s269 + $0x18] sm:$0xf]
        %v274 = vld [vmem:[%s269 + $0x20] sm:$0xf]
        %v275 = vld [vmem:[%s269 + $0x28] sm:$0xf]
        %v276 = vld [vmem:[%s269 + $0x30] sm:$0xf]
        %v277 = vld [vmem:[%s269 + $0x38] sm:$0xf]
        %v278 = vld [vmem:[%s258 + $0x4] sm:$0x1]
        %v279 = vld [vmem:[%s258 + $0xc] sm:$0x1]
        %v280 = vld [vmem:[%s258 + $0x14] sm:$0x1]
        %v281 = vld [vmem:[%s258 + $0x1c] sm:$0x1]
        %v282 = vld [vmem:[%s258 + $0x24] sm:$0x1]
        %v283 = vld [vmem:[%s258 + $0x2c] sm:$0x1]
        %v284 = vld [vmem:[%s258 + $0x34] sm:$0x1]
        %v285 = vld [vmem:[%s258 + $0x3c] sm:$0x1]
        %s286 = sadd.s32 %s225, 1
        %s287 = smul.u32 %s286, 2
        %s288 = smul.addr %s287, 4
        %s289 = scalar_lea.vmem %s215, %s288
        %v290 = vld [vmem:[%s289] sm:$0xf]
        %v291 = vld [vmem:[%s289 + $0x8] sm:$0xf]
        %v292 = vld [vmem:[%s289 + $0x10] sm:$0xf]
        %v293 = vld [vmem:[%s289 + $0x18] sm:$0xf]
        %v294 = vld [vmem:[%s289 + $0x20] sm:$0xf]
        %v295 = vld [vmem:[%s289 + $0x28] sm:$0xf]
        %v296 = vld [vmem:[%s289 + $0x30] sm:$0xf]
        %v297 = vld [vmem:[%s289 + $0x38] sm:$0xf]
        %s298 = sadd.s32 %s287, 18
        %s299 = smul.addr %s298, 4
        %s300 = scalar_lea.vmem %s215, %s299
        %v301 = vld [vmem:[%s300] sm:$0xf]
        %v302 = vld [vmem:[%s300 + $0x8] sm:$0xf]
        %v303 = vld [vmem:[%s300 + $0x10] sm:$0xf]
        %v304 = vld [vmem:[%s300 + $0x18] sm:$0xf]
        %v305 = vld [vmem:[%s300 + $0x20] sm:$0xf]
        %v306 = vld [vmem:[%s300 + $0x28] sm:$0xf]
        %v307 = vld [vmem:[%s300 + $0x30] sm:$0xf]
        %v308 = vld [vmem:[%s300 + $0x38] sm:$0xf]
        %v309 = vld [vmem:[%s289 + $0x4] sm:$0x1]
        %v310 = vld [vmem:[%s289 + $0xc] sm:$0x1]
        %v311 = vld [vmem:[%s289 + $0x14] sm:$0x1]
        %v312 = vld [vmem:[%s289 + $0x1c] sm:$0x1]
        %v313 = vld [vmem:[%s289 + $0x24] sm:$0x1]
        %v314 = vld [vmem:[%s289 + $0x2c] sm:$0x1]
        %v315 = vld [vmem:[%s289 + $0x34] sm:$0x1]
        %v316 = vld [vmem:[%s289 + $0x3c] sm:$0x1]
        %v333 = vunpack.c.l.b16 %v229
        %v334 = vunpack.c.l.b16 %v248
        %v335 = vunpack.c.l.b16 %v230
        %v336 = vunpack.c.l.b16 %v249
        %v337 = vunpack.c.l.b16 %v231
        %v338 = vunpack.c.l.b16 %v250
        %v339 = vunpack.c.l.b16 %v232
        %v340 = vunpack.c.l.b16 %v251
        %v341 = vunpack.c.l.b16 %v233
        %v342 = vunpack.c.l.b16 %v252
        %v343 = vunpack.c.l.b16 %v234
        %v344 = vunpack.c.l.b16 %v253
        %v345 = vunpack.c.l.b16 %v235
        %v346 = vunpack.c.l.b16 %v254
        %v347 = vunpack.c.l.b16 %v236
        %v348 = vunpack.c.l.b16 %v255
        %v349 = vpack.c.b16 %v334, %v333
        %v350 = vpack.c.b16 %v336, %v335
        %v351 = vpack.c.b16 %v338, %v337
        %v352 = vpack.c.b16 %v340, %v339
        %v353 = vpack.c.b16 %v342, %v341
        %v354 = vpack.c.b16 %v344, %v343
        %v355 = vpack.c.b16 %v346, %v345
        %v356 = vpack.c.b16 %v348, %v347
        %v358 = vshrl.u32 %v349, 16
        %v360 = vshll.u32 %v349, 16
        %v362 = vrot.slane %v360, 1
        %v363 = vor.u32 %v358, %v362
        %v365 = vshrl.u32 %v350, 16
        %v367 = vshll.u32 %v350, 16
        %v369 = vrot.slane %v367, 1
        %v370 = vor.u32 %v365, %v369
        %v372 = vshrl.u32 %v351, 16
        %v374 = vshll.u32 %v351, 16
        %v376 = vrot.slane %v374, 1
        %v377 = vor.u32 %v372, %v376
        %v379 = vshrl.u32 %v352, 16
        %v381 = vshll.u32 %v352, 16
        %v383 = vrot.slane %v381, 1
        %v384 = vor.u32 %v379, %v383
        %v386 = vshrl.u32 %v353, 16
        %v388 = vshll.u32 %v353, 16
        %v390 = vrot.slane %v388, 1
        %v391 = vor.u32 %v386, %v390
        %v393 = vshrl.u32 %v354, 16
        %v395 = vshll.u32 %v354, 16
        %v397 = vrot.slane %v395, 1
        %v398 = vor.u32 %v393, %v397
        %v400 = vshrl.u32 %v355, 16
        %v402 = vshll.u32 %v355, 16
        %v404 = vrot.slane %v402, 1
        %v405 = vor.u32 %v400, %v404
        %v407 = vshrl.u32 %v356, 16
        %v409 = vshll.u32 %v356, 16
        %v411 = vrot.slane %v409, 1
        %v412 = vor.u32 %v407, %v411
        %v429 = vunpack.c.l.b16 %v259
        %v430 = vunpack.c.l.b16 %v278
        %v431 = vunpack.c.l.b16 %v260
        %v432 = vunpack.c.l.b16 %v279
        %v433 = vunpack.c.l.b16 %v261
        %v434 = vunpack.c.l.b16 %v280
        %v435 = vunpack.c.l.b16 %v262
        %v436 = vunpack.c.l.b16 %v281
        %v437 = vunpack.c.l.b16 %v263
        %v438 = vunpack.c.l.b16 %v282
        %v439 = vunpack.c.l.b16 %v264
        %v440 = vunpack.c.l.b16 %v283
        %v441 = vunpack.c.l.b16 %v265
        %v442 = vunpack.c.l.b16 %v284
        %v443 = vunpack.c.l.b16 %v266
        %v444 = vunpack.c.l.b16 %v285
        %v445 = vpack.c.b16 %v430, %v429
        %v446 = vpack.c.b16 %v432, %v431
        %v447 = vpack.c.b16 %v434, %v433
        %v448 = vpack.c.b16 %v436, %v435
        %v449 = vpack.c.b16 %v438, %v437
        %v450 = vpack.c.b16 %v440, %v439
        %v451 = vpack.c.b16 %v442, %v441
        %v452 = vpack.c.b16 %v444, %v443
        %v454 = vshrl.u32 %v445, 16
        %v456 = vshll.u32 %v445, 16
        %v458 = vrot.slane %v456, 1
        %v459 = vor.u32 %v454, %v458
        %v461 = vshrl.u32 %v446, 16
        %v463 = vshll.u32 %v446, 16
        %v465 = vrot.slane %v463, 1
        %v466 = vor.u32 %v461, %v465
        %v468 = vshrl.u32 %v447, 16
        %v470 = vshll.u32 %v447, 16
        %v472 = vrot.slane %v470, 1
        %v473 = vor.u32 %v468, %v472
        %v475 = vshrl.u32 %v448, 16
        %v477 = vshll.u32 %v448, 16
        %v479 = vrot.slane %v477, 1
        %v480 = vor.u32 %v475, %v479
        %v482 = vshrl.u32 %v449, 16
        %v484 = vshll.u32 %v449, 16
        %v486 = vrot.slane %v484, 1
        %v487 = vor.u32 %v482, %v486
        %v489 = vshrl.u32 %v450, 16
        %v491 = vshll.u32 %v450, 16
        %v493 = vrot.slane %v491, 1
        %v494 = vor.u32 %v489, %v493
        %v496 = vshrl.u32 %v451, 16
        %v498 = vshll.u32 %v451, 16
        %v500 = vrot.slane %v498, 1
        %v501 = vor.u32 %v496, %v500
        %v503 = vshrl.u32 %v452, 16
        %v505 = vshll.u32 %v452, 16
        %v507 = vrot.slane %v505, 1
        %v508 = vor.u32 %v503, %v507
        %v525 = vunpack.c.l.b16 %v290
        %v526 = vunpack.c.l.b16 %v309
        %v527 = vunpack.c.l.b16 %v291
        %v528 = vunpack.c.l.b16 %v310
        %v529 = vunpack.c.l.b16 %v292
        %v530 = vunpack.c.l.b16 %v311
        %v531 = vunpack.c.l.b16 %v293
        %v532 = vunpack.c.l.b16 %v312
        %v533 = vunpack.c.l.b16 %v294
        %v534 = vunpack.c.l.b16 %v313
        %v535 = vunpack.c.l.b16 %v295
        %v536 = vunpack.c.l.b16 %v314
        %v537 = vunpack.c.l.b16 %v296
        %v538 = vunpack.c.l.b16 %v315
        %v539 = vunpack.c.l.b16 %v297
        %v540 = vunpack.c.l.b16 %v316
        %v541 = vpack.c.b16 %v526, %v525
        %v542 = vpack.c.b16 %v528, %v527
        %v543 = vpack.c.b16 %v530, %v529
        %v544 = vpack.c.b16 %v532, %v531
        %v545 = vpack.c.b16 %v534, %v533
        %v546 = vpack.c.b16 %v536, %v535
        %v547 = vpack.c.b16 %v538, %v537
        %v548 = vpack.c.b16 %v540, %v539
        %v550 = vshrl.u32 %v541, 16
        %v552 = vshll.u32 %v541, 16
        %v554 = vrot.slane %v552, 1
        %v555 = vor.u32 %v550, %v554
        %v557 = vshrl.u32 %v542, 16
        %v559 = vshll.u32 %v542, 16
        %v561 = vrot.slane %v559, 1
        %v562 = vor.u32 %v557, %v561
        %v564 = vshrl.u32 %v543, 16
        %v566 = vshll.u32 %v543, 16
        %v568 = vrot.slane %v566, 1
        %v569 = vor.u32 %v564, %v568
        %v571 = vshrl.u32 %v544, 16
        %v573 = vshll.u32 %v544, 16
        %v575 = vrot.slane %v573, 1
        %v576 = vor.u32 %v571, %v575
        %v578 = vshrl.u32 %v545, 16
        %v580 = vshll.u32 %v545, 16
        %v582 = vrot.slane %v580, 1
        %v583 = vor.u32 %v578, %v582
        %v585 = vshrl.u32 %v546, 16
        %v587 = vshll.u32 %v546, 16
        %v589 = vrot.slane %v587, 1
        %v590 = vor.u32 %v585, %v589
        %v592 = vshrl.u32 %v547, 16
        %v594 = vshll.u32 %v547, 16
        %v596 = vrot.slane %v594, 1
        %v597 = vor.u32 %v592, %v596
        %v599 = vshrl.u32 %v548, 16
        %v601 = vshll.u32 %v548, 16
        %v603 = vrot.slane %v601, 1
        %v604 = vor.u32 %v599, %v603
        %v629 = vunpack.c.l.b16 %v240
        %v630 = vunpack.c.l.b16 %v363
        %v631 = vunpack.c.l.b16 %v270
        %v632 = vunpack.c.l.b16 %v459
        %v633 = vunpack.c.l.b16 %v301
        %v634 = vunpack.c.l.b16 %v555
        %v635 = vunpack.c.l.b16 %v241
        %v636 = vunpack.c.l.b16 %v370
        %v637 = vunpack.c.l.b16 %v271
        %v638 = vunpack.c.l.b16 %v466
        %v639 = vunpack.c.l.b16 %v302
        %v640 = vunpack.c.l.b16 %v562
        %v641 = vunpack.c.l.b16 %v242
        %v642 = vunpack.c.l.b16 %v377
        %v643 = vunpack.c.l.b16 %v272
        %v644 = vunpack.c.l.b16 %v473
        %v645 = vunpack.c.l.b16 %v303
        %v646 = vunpack.c.l.b16 %v569
        %v647 = vunpack.c.l.b16 %v243
        %v648 = vunpack.c.l.b16 %v384
        %v649 = vunpack.c.l.b16 %v273
        %v650 = vunpack.c.l.b16 %v480
        %v651 = vunpack.c.l.b16 %v304
        %v652 = vunpack.c.l.b16 %v576
        %v653 = vunpack.c.l.b16 %v244
        %v654 = vunpack.c.l.b16 %v391
        %v655 = vunpack.c.l.b16 %v274
        %v656 = vunpack.c.l.b16 %v487
        %v657 = vunpack.c.l.b16 %v305
        %v658 = vunpack.c.l.b16 %v583
        %v659 = vunpack.c.l.b16 %v245
        %v660 = vunpack.c.l.b16 %v398
        %v661 = vunpack.c.l.b16 %v275
        %v662 = vunpack.c.l.b16 %v494
        %v663 = vunpack.c.l.b16 %v306
        %v664 = vunpack.c.l.b16 %v590
        %v665 = vunpack.c.l.b16 %v246
        %v666 = vunpack.c.l.b16 %v405
        %v667 = vunpack.c.l.b16 %v276
        %v668 = vunpack.c.l.b16 %v501
        %v669 = vunpack.c.l.b16 %v307
        %v670 = vunpack.c.l.b16 %v597
        %v671 = vunpack.c.l.b16 %v247
        %v672 = vunpack.c.l.b16 %v412
        %v673 = vunpack.c.l.b16 %v277
        %v674 = vunpack.c.l.b16 %v508
        %v675 = vunpack.c.l.b16 %v308
        %v676 = vunpack.c.l.b16 %v604
        %v677 = vld [vmem:[%s219] sm:$0xf]
        %v678 = vld [vmem:[%s219 + $0x4] sm:$0xf]
        %v679 = vld [vmem:[%s219 + $0x8] sm:$0xf]
        %v680 = vld [vmem:[%s219 + $0xc] sm:$0xf]
        %v681 = vld [vmem:[%s219 + $0x10] sm:$0xf]
        %v682 = vld [vmem:[%s219 + $0x14] sm:$0xf]
        %v683 = vld [vmem:[%s219 + $0x18] sm:$0xf]
        %v684 = vld [vmem:[%s219 + $0x1c] sm:$0xf]
        %v685 = vld [vmem:[%s219 + $0x20] sm:$0xf]
        %v686 = vld [vmem:[%s219 + $0x24] sm:$0xf]
        %v687 = vld [vmem:[%s219 + $0x28] sm:$0xf]
        %v688 = vld [vmem:[%s219 + $0x2c] sm:$0xf]
        %v689 = vld [vmem:[%s219 + $0x30] sm:$0xf]
        %v690 = vld [vmem:[%s219 + $0x34] sm:$0xf]
        %v691 = vld [vmem:[%s219 + $0x38] sm:$0xf]
        %v692 = vld [vmem:[%s219 + $0x3c] sm:$0xf]
        %v693 = vld [vmem:[%s219 + $0x40] sm:$0xf]
        %v694 = vld [vmem:[%s219 + $0x44] sm:$0xf]
        %v695 = vld [vmem:[%s219 + $0x48] sm:$0xf]
        %v696 = vld [vmem:[%s219 + $0x4c] sm:$0xf]
        %v697 = vld [vmem:[%s219 + $0x50] sm:$0xf]
        %v698 = vld [vmem:[%s219 + $0x54] sm:$0xf]
        %v699 = vld [vmem:[%s219 + $0x58] sm:$0xf]
        %v700 = vld [vmem:[%s219 + $0x5c] sm:$0xf]
        %v701 = vld [vmem:[%s219 + $0x60] sm:$0xf]
        %v702 = vld [vmem:[%s219 + $0x64] sm:$0xf]
        %v703 = vld [vmem:[%s219 + $0x68] sm:$0xf]
        %v704 = vld [vmem:[%s219 + $0x6c] sm:$0xf]
        %v705 = vld [vmem:[%s219 + $0x70] sm:$0xf]
        %v706 = vld [vmem:[%s219 + $0x74] sm:$0xf]
        %v707 = vld [vmem:[%s219 + $0x78] sm:$0xf]
        %v708 = vld [vmem:[%s219 + $0x7c] sm:$0xf]
        %v709 = vld [vmem:[%s219 + $0x80] sm:$0xf]
        %v710 = vld [vmem:[%s219 + $0x84] sm:$0xf]
        %v711 = vld [vmem:[%s219 + $0x88] sm:$0xf]
        %v712 = vld [vmem:[%s219 + $0x8c] sm:$0xf]
        %v713 = vld [vmem:[%s219 + $0x90] sm:$0xf]
        %v714 = vld [vmem:[%s219 + $0x94] sm:$0xf]
        %v715 = vld [vmem:[%s219 + $0x98] sm:$0xf]
        %v716 = vld [vmem:[%s219 + $0x9c] sm:$0xf]
        %v717 = vld [vmem:[%s219 + $0xa0] sm:$0xf]
        %v718 = vld [vmem:[%s219 + $0xa4] sm:$0xf]
        %v719 = vld [vmem:[%s219 + $0xa8] sm:$0xf]
        %v720 = vld [vmem:[%s219 + $0xac] sm:$0xf]
        %v721 = vld [vmem:[%s219 + $0xb0] sm:$0xf]
        %v722 = vld [vmem:[%s219 + $0xb4] sm:$0xf]
        %v723 = vld [vmem:[%s219 + $0xb8] sm:$0xf]
        %v724 = vld [vmem:[%s219 + $0xbc] sm:$0xf]
        %v725 = vld [vmem:[%s219 + $0xc0] sm:$0xf]
        %v726 = vld [vmem:[%s219 + $0xc4] sm:$0xf]
        %v727 = vld [vmem:[%s219 + $0xc8] sm:$0xf]
        %v728 = vld [vmem:[%s219 + $0xcc] sm:$0xf]
        %v729 = vld [vmem:[%s219 + $0xd0] sm:$0xf]
        %v730 = vld [vmem:[%s219 + $0xd4] sm:$0xf]
        %v731 = vld [vmem:[%s219 + $0xd8] sm:$0xf]
        %v732 = vld [vmem:[%s219 + $0xdc] sm:$0xf]
        %v733 = vld [vmem:[%s219 + $0xe0] sm:$0xf]
        %v734 = vld [vmem:[%s219 + $0xe4] sm:$0xf]
        %v735 = vld [vmem:[%s219 + $0xe8] sm:$0xf]
        %v736 = vld [vmem:[%s219 + $0xec] sm:$0xf]
        %v737 = vld [vmem:[%s219 + $0xf0] sm:$0xf]
        %v738 = vld [vmem:[%s219 + $0xf4] sm:$0xf]
        %v739 = vld [vmem:[%s219 + $0xf8] sm:$0xf]
        %v740 = vld [vmem:[%s219 + $0xfc] sm:$0xf]
        %v741 = vld [vmem:[%s219 + $0x100] sm:$0xf]
        %v742 = vld [vmem:[%s219 + $0x104] sm:$0xf]
        %v743 = vld [vmem:[%s219 + $0x108] sm:$0xf]
        %v744 = vld [vmem:[%s219 + $0x10c] sm:$0xf]
        %v745 = vld [vmem:[%s219 + $0x110] sm:$0xf]
        %v746 = vld [vmem:[%s219 + $0x114] sm:$0xf]
        %v747 = vld [vmem:[%s219 + $0x118] sm:$0xf]
        %v748 = vld [vmem:[%s219 + $0x11c] sm:$0xf]
        %v749 = vld [vmem:[%s219 + $0x120] sm:$0xf]
        %v750 = vld [vmem:[%s219 + $0x124] sm:$0xf]
        %v751 = vld [vmem:[%s219 + $0x128] sm:$0xf]
        %v752 = vld [vmem:[%s219 + $0x12c] sm:$0xf]
        %v753 = vld [vmem:[%s219 + $0x130] sm:$0xf]
        %v754 = vld [vmem:[%s219 + $0x134] sm:$0xf]
        %v755 = vld [vmem:[%s219 + $0x138] sm:$0xf]
        %v756 = vld [vmem:[%s219 + $0x13c] sm:$0xf]
        %v757 = vld [vmem:[%s219 + $0x140] sm:$0xf]
        %v758 = vld [vmem:[%s219 + $0x144] sm:$0xf]
        %v759 = vld [vmem:[%s219 + $0x148] sm:$0xf]
        %v760 = vld [vmem:[%s219 + $0x14c] sm:$0xf]
        %v761 = vld [vmem:[%s219 + $0x150] sm:$0xf]
        %v762 = vld [vmem:[%s219 + $0x154] sm:$0xf]
        %v763 = vld [vmem:[%s219 + $0x158] sm:$0xf]
        %v764 = vld [vmem:[%s219 + $0x15c] sm:$0xf]
        %v765 = vld [vmem:[%s219 + $0x160] sm:$0xf]
        %v766 = vld [vmem:[%s219 + $0x164] sm:$0xf]
        %v767 = vld [vmem:[%s219 + $0x168] sm:$0xf]
        %v768 = vld [vmem:[%s219 + $0x16c] sm:$0xf]
        %v769 = vld [vmem:[%s219 + $0x170] sm:$0xf]
        %v770 = vld [vmem:[%s219 + $0x174] sm:$0xf]
        %v771 = vld [vmem:[%s219 + $0x178] sm:$0xf]
        %v772 = vld [vmem:[%s219 + $0x17c] sm:$0xf]
        %v773 = vld [vmem:[%s219 + $0x180] sm:$0xf]
        %v774 = vld [vmem:[%s219 + $0x184] sm:$0xf]
        %v775 = vld [vmem:[%s219 + $0x188] sm:$0xf]
        %v776 = vld [vmem:[%s219 + $0x18c] sm:$0xf]
        %v777 = vld [vmem:[%s219 + $0x190] sm:$0xf]
        %v778 = vld [vmem:[%s219 + $0x194] sm:$0xf]
        %v779 = vld [vmem:[%s219 + $0x198] sm:$0xf]
        %v780 = vld [vmem:[%s219 + $0x19c] sm:$0xf]
        %v781 = vld [vmem:[%s219 + $0x1a0] sm:$0xf]
        %v782 = vld [vmem:[%s219 + $0x1a4] sm:$0xf]
        %v783 = vld [vmem:[%s219 + $0x1a8] sm:$0xf]
        %v784 = vld [vmem:[%s219 + $0x1ac] sm:$0xf]
        %v785 = vld [vmem:[%s219 + $0x1b0] sm:$0xf]
        %v786 = vld [vmem:[%s219 + $0x1b4] sm:$0xf]
        %v787 = vld [vmem:[%s219 + $0x1b8] sm:$0xf]
        %v788 = vld [vmem:[%s219 + $0x1bc] sm:$0xf]
        %v789 = vld [vmem:[%s219 + $0x1c0] sm:$0xf]
        %v790 = vld [vmem:[%s219 + $0x1c4] sm:$0xf]
        %v791 = vld [vmem:[%s219 + $0x1c8] sm:$0xf]
        %v792 = vld [vmem:[%s219 + $0x1cc] sm:$0xf]
        %v793 = vld [vmem:[%s219 + $0x1d0] sm:$0xf]
        %v794 = vld [vmem:[%s219 + $0x1d4] sm:$0xf]
        %v795 = vld [vmem:[%s219 + $0x1d8] sm:$0xf]
        %v796 = vld [vmem:[%s219 + $0x1dc] sm:$0xf]
        %v797 = vld [vmem:[%s219 + $0x1e0] sm:$0xf]
        %v798 = vld [vmem:[%s219 + $0x1e4] sm:$0xf]
        %v799 = vld [vmem:[%s219 + $0x1e8] sm:$0xf]
        %v800 = vld [vmem:[%s219 + $0x1ec] sm:$0xf]
        %v801 = vld [vmem:[%s219 + $0x1f0] sm:$0xf]
        %v802 = vld [vmem:[%s219 + $0x1f4] sm:$0xf]
        %v803 = vld [vmem:[%s219 + $0x1f8] sm:$0xf]
        %v804 = vld [vmem:[%s219 + $0x1fc] sm:$0xf]
        %v805 = vld [vmem:[%s219 + $0x200] sm:$0xf]
        %v806 = vld [vmem:[%s219 + $0x204] sm:$0xf]
        %v807 = vld [vmem:[%s219 + $0x208] sm:$0xf]
        %v808 = vld [vmem:[%s219 + $0x20c] sm:$0xf]
        %v809 = vld [vmem:[%s219 + $0x210] sm:$0xf]
        %v810 = vld [vmem:[%s219 + $0x214] sm:$0xf]
        %v811 = vld [vmem:[%s219 + $0x218] sm:$0xf]
        %v812 = vld [vmem:[%s219 + $0x21c] sm:$0xf]
        %v813 = vld [vmem:[%s219 + $0x220] sm:$0xf]
        %v814 = vld [vmem:[%s219 + $0x224] sm:$0xf]
        %v815 = vld [vmem:[%s219 + $0x228] sm:$0xf]
        %v816 = vld [vmem:[%s219 + $0x22c] sm:$0xf]
        %v817 = vld [vmem:[%s219 + $0x230] sm:$0xf]
        %v818 = vld [vmem:[%s219 + $0x234] sm:$0xf]
        %v819 = vld [vmem:[%s219 + $0x238] sm:$0xf]
        %v820 = vld [vmem:[%s219 + $0x23c] sm:$0xf]
        %v821 = vld [vmem:[%s222] sm:$0x1]
        %v823 = vlaneseq
        %v824 = vshrl.u32 %v823, 7
        %v825 = vsub.s32 0, %v824
        %v826 = vrot.slane %v821, %v825
        %v828 = vpack.c.b16 %v335, %v333
        %v829 = vpack.c.b16 %v635, %v629
        %v830 = vpack.c.b16 %v636, %v630
        %v831 = vpack.c.b16 %v431, %v429
        %v832 = vpack.c.b16 %v637, %v631
        %v833 = vpack.c.b16 %v638, %v632
        %v834 = vpack.c.b16 %v527, %v525
        %v835 = vpack.c.b16 %v639, %v633
        %v836 = vpack.c.b16 %v640, %v634
        %v837 = vpack.c.b16 %v339, %v337
        %v838 = vpack.c.b16 %v647, %v641
        %v839 = vpack.c.b16 %v648, %v642
        %v840 = vpack.c.b16 %v435, %v433
        %v841 = vpack.c.b16 %v649, %v643
        %v842 = vpack.c.b16 %v650, %v644
        %v843 = vpack.c.b16 %v531, %v529
        %v844 = vpack.c.b16 %v651, %v645
        %v845 = vpack.c.b16 %v652, %v646
        %v846 = vpack.c.b16 %v343, %v341
        %v847 = vpack.c.b16 %v659, %v653
        %v848 = vpack.c.b16 %v660, %v654
        %v849 = vpack.c.b16 %v439, %v437
        %v850 = vpack.c.b16 %v661, %v655
        %v851 = vpack.c.b16 %v662, %v656
        %v852 = vpack.c.b16 %v535, %v533
        %v853 = vpack.c.b16 %v663, %v657
        %v854 = vpack.c.b16 %v664, %v658
        %v855 = vpack.c.b16 %v347, %v345
        %v856 = vpack.c.b16 %v671, %v665
        %v857 = vpack.c.b16 %v672, %v666
        %v858 = vpack.c.b16 %v443, %v441
        %v859 = vpack.c.b16 %v673, %v667
        %v860 = vpack.c.b16 %v674, %v668
        %v861 = vpack.c.b16 %v539, %v537
        %v862 = vpack.c.b16 %v675, %v669
        %v863 = vpack.c.b16 %v676, %v670
        %v1044 = vunpack.c.l.b16 %v677
        %v1045 = vunpack.c.l.b16 %v678
        %v1046 = vunpack.c.l.b16 %v679
        %v1047 = vunpack.c.l.b16 %v680
        %v1048 = vunpack.c.l.b16 %v681
        %v1049 = vunpack.c.l.b16 %v682
        %v1050 = vunpack.c.l.b16 %v683
        %v1051 = vunpack.c.l.b16 %v684
        %v1052 = vunpack.c.l.b16 %v685
        %v1053 = vunpack.c.l.b16 %v686
        %v1054 = vunpack.c.l.b16 %v687
        %v1055 = vunpack.c.l.b16 %v688
        %v1056 = vunpack.c.l.b16 %v689
        %v1057 = vunpack.c.l.b16 %v690
        %v1058 = vunpack.c.l.b16 %v691
        %v1059 = vunpack.c.l.b16 %v692
        %v1060 = vunpack.c.l.b16 %v693
        %v1061 = vunpack.c.l.b16 %v694
        %v1062 = vunpack.c.l.b16 %v695
        %v1063 = vunpack.c.l.b16 %v696
        %v1064 = vunpack.c.l.b16 %v697
        %v1065 = vunpack.c.l.b16 %v698
        %v1066 = vunpack.c.l.b16 %v699
        %v1067 = vunpack.c.l.b16 %v700
        %v1068 = vunpack.c.l.b16 %v701
        %v1069 = vunpack.c.l.b16 %v702
        %v1070 = vunpack.c.l.b16 %v703
        %v1071 = vunpack.c.l.b16 %v704
        %v1072 = vunpack.c.l.b16 %v705
        %v1073 = vunpack.c.l.b16 %v706
        %v1074 = vunpack.c.l.b16 %v707
        %v1075 = vunpack.c.l.b16 %v708
        %v1076 = vunpack.c.l.b16 %v709
        %v1077 = vunpack.c.l.b16 %v710
        %v1078 = vunpack.c.l.b16 %v711
        %v1079 = vunpack.c.l.b16 %v712
        %v1080 = vunpack.c.l.b16 %v713
        %v1081 = vunpack.c.l.b16 %v714
        %v1082 = vunpack.c.l.b16 %v715
        %v1083 = vunpack.c.l.b16 %v716
        %v1084 = vunpack.c.l.b16 %v717
        %v1085 = vunpack.c.l.b16 %v718
        %v1086 = vunpack.c.l.b16 %v719
        %v1087 = vunpack.c.l.b16 %v720
        %v1088 = vunpack.c.l.b16 %v721
        %v1089 = vunpack.c.l.b16 %v722
        %v1090 = vunpack.c.l.b16 %v723
        %v1091 = vunpack.c.l.b16 %v724
        %v1092 = vunpack.c.l.b16 %v725
        %v1093 = vunpack.c.l.b16 %v726
        %v1094 = vunpack.c.l.b16 %v727
        %v1095 = vunpack.c.l.b16 %v728
        %v1096 = vunpack.c.l.b16 %v729
        %v1097 = vunpack.c.l.b16 %v730
        %v1098 = vunpack.c.l.b16 %v731
        %v1099 = vunpack.c.l.b16 %v732
        %v1100 = vunpack.c.l.b16 %v733
        %v1101 = vunpack.c.l.b16 %v734
        %v1102 = vunpack.c.l.b16 %v735
        %v1103 = vunpack.c.l.b16 %v736
        %v1104 = vunpack.c.l.b16 %v737
        %v1105 = vunpack.c.l.b16 %v738
        %v1106 = vunpack.c.l.b16 %v739
        %v1107 = vunpack.c.l.b16 %v740
        %v1108 = vunpack.c.l.b16 %v741
        %v1109 = vunpack.c.l.b16 %v742
        %v1110 = vunpack.c.l.b16 %v743
        %v1111 = vunpack.c.l.b16 %v744
        %v1112 = vunpack.c.l.b16 %v745
        %v1113 = vunpack.c.l.b16 %v746
        %v1114 = vunpack.c.l.b16 %v747
        %v1115 = vunpack.c.l.b16 %v748
        %v1116 = vunpack.c.l.b16 %v749
        %v1117 = vunpack.c.l.b16 %v750
        %v1118 = vunpack.c.l.b16 %v751
        %v1119 = vunpack.c.l.b16 %v752
        %v1120 = vunpack.c.l.b16 %v753
        %v1121 = vunpack.c.l.b16 %v754
        %v1122 = vunpack.c.l.b16 %v755
        %v1123 = vunpack.c.l.b16 %v756
        %v1124 = vunpack.c.l.b16 %v757
        %v1125 = vunpack.c.l.b16 %v758
        %v1126 = vunpack.c.l.b16 %v759
        %v1127 = vunpack.c.l.b16 %v760
        %v1128 = vunpack.c.l.b16 %v761
        %v1129 = vunpack.c.l.b16 %v762
        %v1130 = vunpack.c.l.b16 %v763
        %v1131 = vunpack.c.l.b16 %v764
        %v1132 = vunpack.c.l.b16 %v765
        %v1133 = vunpack.c.l.b16 %v766
        %v1134 = vunpack.c.l.b16 %v767
        %v1135 = vunpack.c.l.b16 %v768
        %v1136 = vunpack.c.l.b16 %v769
        %v1137 = vunpack.c.l.b16 %v770
        %v1138 = vunpack.c.l.b16 %v771
        %v1139 = vunpack.c.l.b16 %v772
        %v1140 = vunpack.c.l.b16 %v773
        %v1141 = vunpack.c.l.b16 %v774
        %v1142 = vunpack.c.l.b16 %v775
        %v1143 = vunpack.c.l.b16 %v776
        %v1144 = vunpack.c.l.b16 %v777
        %v1145 = vunpack.c.l.b16 %v778
        %v1146 = vunpack.c.l.b16 %v779
        %v1147 = vunpack.c.l.b16 %v780
        %v1148 = vunpack.c.l.b16 %v781
        %v1149 = vunpack.c.l.b16 %v782
        %v1150 = vunpack.c.l.b16 %v783
        %v1151 = vunpack.c.l.b16 %v784
        %v1152 = vunpack.c.l.b16 %v785
        %v1153 = vunpack.c.l.b16 %v786
        %v1154 = vunpack.c.l.b16 %v787
        %v1155 = vunpack.c.l.b16 %v788
        %v1156 = vunpack.c.l.b16 %v789
        %v1157 = vunpack.c.l.b16 %v790
        %v1158 = vunpack.c.l.b16 %v791
        %v1159 = vunpack.c.l.b16 %v792
        %v1160 = vunpack.c.l.b16 %v793
        %v1161 = vunpack.c.l.b16 %v794
        %v1162 = vunpack.c.l.b16 %v795
        %v1163 = vunpack.c.l.b16 %v796
        %v1164 = vunpack.c.l.b16 %v797
        %v1165 = vunpack.c.l.b16 %v798
        %v1166 = vunpack.c.l.b16 %v799
        %v1167 = vunpack.c.l.b16 %v800
        %v1168 = vunpack.c.l.b16 %v801
        %v1169 = vunpack.c.l.b16 %v802
        %v1170 = vunpack.c.l.b16 %v803
        %v1171 = vunpack.c.l.b16 %v804
        %v1172 = vunpack.c.l.b16 %v805
        %v1173 = vunpack.c.l.b16 %v806
        %v1174 = vunpack.c.l.b16 %v807
        %v1175 = vunpack.c.l.b16 %v808
        %v1176 = vunpack.c.l.b16 %v809
        %v1177 = vunpack.c.l.b16 %v810
        %v1178 = vunpack.c.l.b16 %v811
        %v1179 = vunpack.c.l.b16 %v812
        %v1180 = vunpack.c.l.b16 %v813
        %v1181 = vunpack.c.l.b16 %v814
        %v1182 = vunpack.c.l.b16 %v815
        %v1183 = vunpack.c.l.b16 %v816
        %v1184 = vunpack.c.l.b16 %v817
        %v1185 = vunpack.c.l.b16 %v818
        %v1186 = vunpack.c.l.b16 %v819
        %v1187 = vunpack.c.l.b16 %v820
        %v1188 = vpack.c.b16 %v1045, %v1044
        %v1189 = vpack.c.b16 %v1047, %v1046
        %v1190 = vpack.c.b16 %v1049, %v1048
        %v1191 = vpack.c.b16 %v1051, %v1050
        %v1192 = vpack.c.b16 %v1053, %v1052
        %v1193 = vpack.c.b16 %v1055, %v1054
        %v1194 = vpack.c.b16 %v1057, %v1056
        %v1195 = vpack.c.b16 %v1059, %v1058
        %v1196 = vpack.c.b16 %v1061, %v1060
        %v1197 = vpack.c.b16 %v1063, %v1062
        %v1198 = vpack.c.b16 %v1065, %v1064
        %v1199 = vpack.c.b16 %v1067, %v1066
        %v1200 = vpack.c.b16 %v1069, %v1068
        %v1201 = vpack.c.b16 %v1071, %v1070
        %v1202 = vpack.c.b16 %v1073, %v1072
        %v1203 = vpack.c.b16 %v1075, %v1074
        %v1204 = vpack.c.b16 %v1077, %v1076
        %v1205 = vpack.c.b16 %v1079, %v1078
        %v1206 = vpack.c.b16 %v1081, %v1080
        %v1207 = vpack.c.b16 %v1083, %v1082
        %v1208 = vpack.c.b16 %v1085, %v1084
        %v1209 = vpack.c.b16 %v1087, %v1086
        %v1210 = vpack.c.b16 %v1089, %v1088
        %v1211 = vpack.c.b16 %v1091, %v1090
        %v1212 = vpack.c.b16 %v1093, %v1092
        %v1213 = vpack.c.b16 %v1095, %v1094
        %v1214 = vpack.c.b16 %v1097, %v1096
        %v1215 = vpack.c.b16 %v1099, %v1098
        %v1216 = vpack.c.b16 %v1101, %v1100
        %v1217 = vpack.c.b16 %v1103, %v1102
        %v1218 = vpack.c.b16 %v1105, %v1104
        %v1219 = vpack.c.b16 %v1107, %v1106
        %v1220 = vpack.c.b16 %v1109, %v1108
        %v1221 = vpack.c.b16 %v1111, %v1110
        %v1222 = vpack.c.b16 %v1113, %v1112
        %v1223 = vpack.c.b16 %v1115, %v1114
        %v1224 = vpack.c.b16 %v1117, %v1116
        %v1225 = vpack.c.b16 %v1119, %v1118
        %v1226 = vpack.c.b16 %v1121, %v1120
        %v1227 = vpack.c.b16 %v1123, %v1122
        %v1228 = vpack.c.b16 %v1125, %v1124
        %v1229 = vpack.c.b16 %v1127, %v1126
        %v1230 = vpack.c.b16 %v1129, %v1128
        %v1231 = vpack.c.b16 %v1131, %v1130
        %v1232 = vpack.c.b16 %v1133, %v1132
        %v1233 = vpack.c.b16 %v1135, %v1134
        %v1234 = vpack.c.b16 %v1137, %v1136
        %v1235 = vpack.c.b16 %v1139, %v1138
        %v1236 = vpack.c.b16 %v1141, %v1140
        %v1237 = vpack.c.b16 %v1143, %v1142
        %v1238 = vpack.c.b16 %v1145, %v1144
        %v1239 = vpack.c.b16 %v1147, %v1146
        %v1240 = vpack.c.b16 %v1149, %v1148
        %v1241 = vpack.c.b16 %v1151, %v1150
        %v1242 = vpack.c.b16 %v1153, %v1152
        %v1243 = vpack.c.b16 %v1155, %v1154
        %v1244 = vpack.c.b16 %v1157, %v1156
        %v1245 = vpack.c.b16 %v1159, %v1158
        %v1246 = vpack.c.b16 %v1161, %v1160
        %v1247 = vpack.c.b16 %v1163, %v1162
        %v1248 = vpack.c.b16 %v1165, %v1164
        %v1249 = vpack.c.b16 %v1167, %v1166
        %v1250 = vpack.c.b16 %v1169, %v1168
        %v1251 = vpack.c.b16 %v1171, %v1170
        %v1252 = vpack.c.b16 %v1173, %v1172
        %v1253 = vpack.c.b16 %v1175, %v1174
        %v1254 = vpack.c.b16 %v1177, %v1176
        %v1255 = vpack.c.b16 %v1179, %v1178
        %v1256 = vpack.c.b16 %v1181, %v1180
        %v1257 = vpack.c.b16 %v1183, %v1182
        %v1258 = vpack.c.b16 %v1185, %v1184
        %v1259 = vpack.c.b16 %v1187, %v1186
        %1332 = vmatprep.subr.bf16.mxu0 0
        %1333 = vmatpush1.bf16.msra.mxu0 %v1188
        %1334 = vmatprep.subr.bf16.mxu0 0
        %1335 = vmatpush1.bf16.msra.mxu0 %v1189
        %1336 = vmatprep.subr.bf16.mxu0 0
        %1337 = vmatpush1.bf16.msra.mxu0 %v1190
        %1338 = vmatprep.subr.bf16.mxu0 0
        %1339 = vmatpush1.bf16.msra.mxu0 %v1191
        %1340 = vmatprep.subr.bf16.mxu0 0
        %1341 = vmatpush1.bf16.msra.mxu0 %v1192
        %1342 = vmatprep.subr.bf16.mxu0 0
        %1343 = vmatpush1.bf16.msra.mxu0 %v1193
        %1344 = vmatprep.subr.bf16.mxu0 0
        %1345 = vmatpush1.bf16.msra.mxu0 %v1194
        %1346 = vmatprep.subr.bf16.mxu0 0
        %1347 = vmatpush1.bf16.msra.mxu0 %v1195
        %1348 = vmatprep.subr.bf16.mxu0 0
        %1349 = vmatpush1.bf16.msra.mxu0 %v1196
        %1350 = vmatprep.subr.bf16.mxu0 0
        %1351 = vmatpush1.bf16.msra.mxu0 %v1197
        %1352 = vmatprep.subr.bf16.mxu0 0
        %1353 = vmatpush1.bf16.msra.mxu0 %v1198
        %1354 = vmatprep.subr.bf16.mxu0 0
        %1355 = vmatpush1.bf16.msra.mxu0 %v1199
        %1356 = vmatprep.subr.bf16.mxu0 0
        %1357 = vmatpush1.bf16.msra.mxu0 %v1200
        %1358 = vmatprep.subr.bf16.mxu0 0
        %1359 = vmatpush1.bf16.msra.mxu0 %v1201
        %1360 = vmatprep.subr.bf16.mxu0 0
        %1361 = vmatpush1.bf16.msra.mxu0 %v1202
        %1362 = vmatprep.subr.bf16.mxu0 0
        %1363 = vmatpush1.bf16.msra.mxu0 %v1203
        %1364 = vmatprep.mubr.bf16.mxu0 %v829
        %1365 = vmatmul.mubr.bf16.gmra.mrb[0].mxu0 %v828
        %v1366 = vpop.f32.mrb[0].mxu0
        %v1367 = vadd.f32 %v826, %v1366
        %v1368 = vpop.f32.mrb[0].mxu0
        %v1369 = vpop.f32.mrb[0].mxu0
        %v1370 = vadd.f32 %v826, %v1369
        %v1371 = vpop.f32.mrb[0].mxu0
        %1372 = vmatprep.mubr.bf16.mxu0 %v838
        %1373 = vmatmul.mubr.bf16.gmra.mrb[0].mxu0 %v837
        %v1374 = vpop.f32.mrb[0].mxu0
        %v1375 = vadd.f32 %v826, %v1374
        %v1376 = vpop.f32.mrb[0].mxu0
        %v1377 = vpop.f32.mrb[0].mxu0
        %v1378 = vadd.f32 %v826, %v1377
        %v1379 = vpop.f32.mrb[0].mxu0
        %1380 = vmatprep.mubr.bf16.mxu0 %v847
        %1381 = vmatmul.mubr.bf16.gmra.mrb[0].mxu0 %v846
        %v1382 = vpop.f32.mrb[0].mxu0
        %v1383 = vadd.f32 %v826, %v1382
        %v1384 = vpop.f32.mrb[0].mxu0
        %v1385 = vpop.f32.mrb[0].mxu0
        %v1386 = vadd.f32 %v826, %v1385
        %v1387 = vpop.f32.mrb[0].mxu0
        %1388 = vmatprep.mubr.bf16.mxu0 %v856
        %1389 = vmatmul.mubr.bf16.gmra.mrb[0].mxu0 %v855
        %v1390 = vpop.f32.mrb[0].mxu0
        %v1391 = vadd.f32 %v826, %v1390
        %v1392 = vpop.f32.mrb[0].mxu0
        %v1393 = vpop.f32.mrb[0].mxu0
        %v1394 = vadd.f32 %v826, %v1393
        %v1395 = vpop.f32.mrb[0].mxu0
        %1396 = vdwg.mxu0
        %1397 = vmatprep.subr.bf16.mxu0 0
        %1398 = vmatpush1.bf16.msra.mxu0 %v1204
        %1399 = vmatprep.subr.bf16.mxu0 0
        %1400 = vmatpush1.bf16.msra.mxu0 %v1205
        %1401 = vmatprep.subr.bf16.mxu0 0
        %1402 = vmatpush1.bf16.msra.mxu0 %v1206
        %1403 = vmatprep.subr.bf16.mxu0 0
        %1404 = vmatpush1.bf16.msra.mxu0 %v1207
        %1405 = vmatprep.subr.bf16.mxu0 0
        %1406 = vmatpush1.bf16.msra.mxu0 %v1208
        %1407 = vmatprep.subr.bf16.mxu0 0
        %1408 = vmatpush1.bf16.msra.mxu0 %v1209
        %1409 = vmatprep.subr.bf16.mxu0 0
        %1410 = vmatpush1.bf16.msra.mxu0 %v1210
        %1411 = vmatprep.subr.bf16.mxu0 0
        %1412 = vmatpush1.bf16.msra.mxu0 %v1211
        %1413 = vmatprep.subr.bf16.mxu0 0
        %1414 = vmatpush1.bf16.msra.mxu0 %v1212
        %1415 = vmatprep.subr.bf16.mxu0 0
        %1416 = vmatpush1.bf16.msra.mxu0 %v1213
        %1417 = vmatprep.subr.bf16.mxu0 0
        %1418 = vmatpush1.bf16.msra.mxu0 %v1214
        %1419 = vmatprep.subr.bf16.mxu0 0
        %1420 = vmatpush1.bf16.msra.mxu0 %v1215
        %1421 = vmatprep.subr.bf16.mxu0 0
        %1422 = vmatpush1.bf16.msra.mxu0 %v1216
        %1423 = vmatprep.subr.bf16.mxu0 0
        %1424 = vmatpush1.bf16.msra.mxu0 %v1217
        %1425 = vmatprep.subr.bf16.mxu0 0
        %1426 = vmatpush1.bf16.msra.mxu0 %v1218
        %1427 = vmatprep.subr.bf16.mxu0 0
        %1428 = vmatpush1.bf16.msra.mxu0 %v1219
        %1429 = vmatprep.mubr.bf16.mxu0 %v831
        %1430 = vmatmul.mubr.bf16.gmra.mrb[0].mxu0 %v830
        %v1431 = vpop.f32.mrb[0].mxu0
        %v1432 = vadd.f32 %v1367, %v1431
        %v1433 = vpop.f32.mrb[0].mxu0
        %v1434 = vpop.f32.mrb[0].mxu0
        %v1435 = vadd.f32 %v1370, %v1434
        %v1436 = vpop.f32.mrb[0].mxu0
        %1437 = vmatprep.mubr.bf16.mxu0 %v840
        %1438 = vmatmul.mubr.bf16.gmra.mrb[0].mxu0 %v839
        %v1439 = vpop.f32.mrb[0].mxu0
        %v1440 = vadd.f32 %v1375, %v1439
        %v1441 = vpop.f32.mrb[0].mxu0
        %v1442 = vpop.f32.mrb[0].mxu0
        %v1443 = vadd.f32 %v1378, %v1442
        %v1444 = vpop.f32.mrb[0].mxu0
        %1445 = vmatprep.mubr.bf16.mxu0 %v849
        %1446 = vmatmul.mubr.bf16.gmra.mrb[0].mxu0 %v848
        %v1447 = vpop.f32.mrb[0].mxu0
        %v1448 = vadd.f32 %v1383, %v1447
        %v1449 = vpop.f32.mrb[0].mxu0
        %v1450 = vpop.f32.mrb[0].mxu0
        %v1451 = vadd.f32 %v1386, %v1450
        %v1452 = vpop.f32.mrb[0].mxu0
        %1453 = vmatprep.mubr.bf16.mxu0 %v858
        %1454 = vmatmul.mubr.bf16.gmra.mrb[0].mxu0 %v857
        %v1455 = vpop.f32.mrb[0].mxu0
        %v1456 = vadd.f32 %v1391, %v1455
        %v1457 = vpop.f32.mrb[0].mxu0
        %v1458 = vpop.f32.mrb[0].mxu0
        %v1459 = vadd.f32 %v1394, %v1458
        %v1460 = vpop.f32.mrb[0].mxu0
        %1461 = vdwg.mxu0
        %1462 = vmatprep.subr.bf16.mxu0 0
        %1463 = vmatpush1.bf16.msra.mxu0 %v1220
        %1464 = vmatprep.subr.bf16.mxu0 0
        %1465 = vmatpush1.bf16.msra.mxu0 %v1221
        %1466 = vmatprep.subr.bf16.mxu0 0
        %1467 = vmatpush1.bf16.msra.mxu0 %v1222
        %1468 = vmatprep.subr.bf16.mxu0 0
        %1469 = vmatpush1.bf16.msra.mxu0 %v1223
        %1470 = vmatprep.subr.bf16.mxu0 0
        %1471 = vmatpush1.bf16.msra.mxu0 %v1224
        %1472 = vmatprep.subr.bf16.mxu0 0
        %1473 = vmatpush1.bf16.msra.mxu0 %v1225
        %1474 = vmatprep.subr.bf16.mxu0 0
        %1475 = vmatpush1.bf16.msra.mxu0 %v1226
        %1476 = vmatprep.subr.bf16.mxu0 0
        %1477 = vmatpush1.bf16.msra.mxu0 %v1227
        %1478 = vmatprep.subr.bf16.mxu0 0
        %1479 = vmatpush1.bf16.msra.mxu0 %v1228
        %1480 = vmatprep.subr.bf16.mxu0 0
        %1481 = vmatpush1.bf16.msra.mxu0 %v1229
        %1482 = vmatprep.subr.bf16.mxu0 0
        %1483 = vmatpush1.bf16.msra.mxu0 %v1230
        %1484 = vmatprep.subr.bf16.mxu0 0
        %1485 = vmatpush1.bf16.msra.mxu0 %v1231
        %1486 = vmatprep.subr.bf16.mxu0 0
        %1487 = vmatpush1.bf16.msra.mxu0 %v1232
        %1488 = vmatprep.subr.bf16.mxu0 0
        %1489 = vmatpush1.bf16.msra.mxu0 %v1233
        %1490 = vmatprep.subr.bf16.mxu0 0
        %1491 = vmatpush1.bf16.msra.mxu0 %v1234
        %1492 = vmatprep.subr.bf16.mxu0 0
        %1493 = vmatpush1.bf16.msra.mxu0 %v1235
        %1494 = vmatprep.mubr.bf16.mxu0 %v833
        %1495 = vmatmul.mubr.bf16.gmra.mrb[0].mxu0 %v832
        %v1496 = vpop.f32.mrb[0].mxu0
        %v1497 = vadd.f32 %v1432, %v1496
        %v1498 = vpop.f32.mrb[0].mxu0
        %v1499 = vpop.f32.mrb[0].mxu0
        %v1500 = vadd.f32 %v1435, %v1499
        %v1501 = vpop.f32.mrb[0].mxu0
        %1502 = vmatprep.mubr.bf16.mxu0 %v842
        %1503 = vmatmul.mubr.bf16.gmra.mrb[0].mxu0 %v841
        %v1504 = vpop.f32.mrb[0].mxu0
        %v1505 = vadd.f32 %v1440, %v1504
        %v1506 = vpop.f32.mrb[0].mxu0
        %v1507 = vpop.f32.mrb[0].mxu0
        %v1508 = vadd.f32 %v1443, %v1507
        %v1509 = vpop.f32.mrb[0].mxu0
        %1510 = vmatprep.mubr.bf16.mxu0 %v851
        %1511 = vmatmul.mubr.bf16.gmra.mrb[0].mxu0 %v850
        %v1512 = vpop.f32.mrb[0].mxu0
        %v1513 = vadd.f32 %v1448, %v1512
        %v1514 = vpop.f32.mrb[0].mxu0
        %v1515 = vpop.f32.mrb[0].mxu0
        %v1516 = vadd.f32 %v1451, %v1515
        %v1517 = vpop.f32.mrb[0].mxu0
        %1518 = vmatprep.mubr.bf16.mxu0 %v860
        %1519 = vmatmul.mubr.bf16.gmra.mrb[0].mxu0 %v859
        %v1520 = vpop.f32.mrb[0].mxu0
        %v1521 = vadd.f32 %v1456, %v1520
        %v1522 = vpop.f32.mrb[0].mxu0
        %v1523 = vpop.f32.mrb[0].mxu0
        %v1524 = vadd.f32 %v1459, %v1523
        %v1525 = vpop.f32.mrb[0].mxu0
        %1526 = vdwg.mxu0
        %1527 = vmatprep.subr.bf16.mxu0 0
        %1528 = vmatpush1.bf16.msra.mxu0 %v1236
        %1529 = vmatprep.subr.bf16.mxu0 0
        %1530 = vmatpush1.bf16.msra.mxu0 %v1237
        %1531 = vmatprep.subr.bf16.mxu0 0
        %1532 = vmatpush1.bf16.msra.mxu0 %v1238
        %1533 = vmatprep.subr.bf16.mxu0 0
        %1534 = vmatpush1.bf16.msra.mxu0 %v1239
        %1535 = vmatprep.subr.bf16.mxu0 0
        %1536 = vmatpush1.bf16.msra.mxu0 %v1240
        %1537 = vmatprep.subr.bf16.mxu0 0
        %1538 = vmatpush1.bf16.msra.mxu0 %v1241
        %1539 = vmatprep.subr.bf16.mxu0 0
        %1540 = vmatpush1.bf16.msra.mxu0 %v1242
        %1541 = vmatprep.subr.bf16.mxu0 0
        %1542 = vmatpush1.bf16.msra.mxu0 %v1243
        %1543 = vmatprep.subr.bf16.mxu0 0
        %1544 = vmatpush1.bf16.msra.mxu0 %v1244
        %1545 = vmatprep.subr.bf16.mxu0 0
        %1546 = vmatpush1.bf16.msra.mxu0 %v1245
        %1547 = vmatprep.subr.bf16.mxu0 0
        %1548 = vmatpush1.bf16.msra.mxu0 %v1246
        %1549 = vmatprep.subr.bf16.mxu0 0
        %1550 = vmatpush1.bf16.msra.mxu0 %v1247
        %1551 = vmatprep.subr.bf16.mxu0 0
        %1552 = vmatpush1.bf16.msra.mxu0 %v1248
        %1553 = vmatprep.subr.bf16.mxu0 0
        %1554 = vmatpush1.bf16.msra.mxu0 %v1249
        %1555 = vmatprep.subr.bf16.mxu0 0
        %1556 = vmatpush1.bf16.msra.mxu0 %v1250
        %1557 = vmatprep.subr.bf16.mxu0 0
        %1558 = vmatpush1.bf16.msra.mxu0 %v1251
        %1559 = vmatprep.mubr.bf16.mxu0 %v835
        %1560 = vmatmul.mubr.bf16.gmra.mrb[0].mxu0 %v834
        %v1561 = vpop.f32.mrb[0].mxu0
        %v1562 = vadd.f32 %v1497, %v1561
        %v1563 = vpop.f32.mrb[0].mxu0
        %v1564 = vpop.f32.mrb[0].mxu0
        %v1565 = vadd.f32 %v1500, %v1564
        %v1566 = vpop.f32.mrb[0].mxu0
        %1567 = vmatprep.mubr.bf16.mxu0 %v844
        %1568 = vmatmul.mubr.bf16.gmra.mrb[0].mxu0 %v843
        %v1569 = vpop.f32.mrb[0].mxu0
        %v1570 = vadd.f32 %v1505, %v1569
        %v1571 = vpop.f32.mrb[0].mxu0
        %v1572 = vpop.f32.mrb[0].mxu0
        %v1573 = vadd.f32 %v1508, %v1572
        %v1574 = vpop.f32.mrb[0].mxu0
        %1575 = vmatprep.mubr.bf16.mxu0 %v853
        %1576 = vmatmul.mubr.bf16.gmra.mrb[0].mxu0 %v852
        %v1577 = vpop.f32.mrb[0].mxu0
        %v1578 = vadd.f32 %v1513, %v1577
        %v1579 = vpop.f32.mrb[0].mxu0
        %v1580 = vpop.f32.mrb[0].mxu0
        %v1581 = vadd.f32 %v1516, %v1580
        %v1582 = vpop.f32.mrb[0].mxu0
        %1583 = vmatprep.mubr.bf16.mxu0 %v862
        %1584 = vmatmul.mubr.bf16.gmra.mrb[0].mxu0 %v861
        %v1585 = vpop.f32.mrb[0].mxu0
        %v1586 = vadd.f32 %v1521, %v1585
        %v1587 = vpop.f32.mrb[0].mxu0
        %v1588 = vpop.f32.mrb[0].mxu0
        %v1589 = vadd.f32 %v1524, %v1588
        %v1590 = vpop.f32.mrb[0].mxu0
        %1591 = vdwg.mxu0
        %1592 = vmatprep.subr.bf16.mxu0 0
        %1593 = vmatpush1.bf16.msra.mxu0 %v1252
        %1594 = vmatprep.subr.bf16.mxu0 0
        %1595 = vmatpush1.bf16.msra.mxu0 %v1253
        %1596 = vmatprep.subr.bf16.mxu0 0
        %1597 = vmatpush1.bf16.msra.mxu0 %v1254
        %1598 = vmatprep.subr.bf16.mxu0 0
        %1599 = vmatpush1.bf16.msra.mxu0 %v1255
        %1600 = vmatprep.subr.bf16.mxu0 0
        %1601 = vmatpush1.bf16.msra.mxu0 %v1256
        %1602 = vmatprep.subr.bf16.mxu0 0
        %1603 = vmatpush1.bf16.msra.mxu0 %v1257
        %1604 = vmatprep.subr.bf16.mxu0 0
        %1605 = vmatpush1.bf16.msra.mxu0 %v1258
        %1606 = vmatprep.subr.bf16.mxu0 0
        %1607 = vmatpush1.bf16.msra.mxu0 %v1259
        %1608 = vmatprep.subr.bf16.mxu0 0
        %1609 = vmatpush1.bf16.msra.mxu0 0
        %1610 = vmatprep.subr.bf16.mxu0 0
        %1611 = vmatpush1.bf16.msra.mxu0 0
        %1612 = vmatprep.subr.bf16.mxu0 0
        %1613 = vmatpush1.bf16.msra.mxu0 0
        %1614 = vmatprep.subr.bf16.mxu0 0
        %1615 = vmatpush1.bf16.msra.mxu0 0
        %1616 = vmatprep.subr.bf16.mxu0 0
        %1617 = vmatpush1.bf16.msra.mxu0 0
        %1618 = vmatprep.subr.bf16.mxu0 0
        %1619 = vmatpush1.bf16.msra.mxu0 0
        %1620 = vmatprep.subr.bf16.mxu0 0
        %1621 = vmatpush1.bf16.msra.mxu0 0
        %1622 = vmatprep.subr.bf16.mxu0 0
        %1623 = vmatpush1.bf16.msra.mxu0 0
        %1624 = vmatprep.mubr.bf16.mxu0 0
        %1625 = vmatmul.mubr.bf16.gmra.mrb[0].mxu0 %v836
        %v1626 = vpop.f32.mrb[0].mxu0
        %v1627 = vadd.f32 %v1562, %v1626
        %v1628 = vpop.f32.mrb[0].mxu0
        %v1629 = vpop.f32.mrb[0].mxu0
        %v1630 = vadd.f32 %v1565, %v1629
        %v1631 = vpop.f32.mrb[0].mxu0
        %1632 = vmatprep.mubr.bf16.mxu0 0
        %1633 = vmatmul.mubr.bf16.gmra.mrb[0].mxu0 %v845
        %v1634 = vpop.f32.mrb[0].mxu0
        %v1635 = vadd.f32 %v1570, %v1634
        %v1636 = vpop.f32.mrb[0].mxu0
        %v1637 = vpop.f32.mrb[0].mxu0
        %v1638 = vadd.f32 %v1573, %v1637
        %v1639 = vpop.f32.mrb[0].mxu0
        %1640 = vmatprep.mubr.bf16.mxu0 0
        %1641 = vmatmul.mubr.bf16.gmra.mrb[0].mxu0 %v854
        %v1642 = vpop.f32.mrb[0].mxu0
        %v1643 = vadd.f32 %v1578, %v1642
        %v1644 = vpop.f32.mrb[0].mxu0
        %v1645 = vpop.f32.mrb[0].mxu0
        %v1646 = vadd.f32 %v1581, %v1645
        %v1647 = vpop.f32.mrb[0].mxu0
        %1648 = vmatprep.mubr.bf16.mxu0 0
        %1649 = vmatmul.mubr.bf16.gmra.mrb[0].mxu0 %v863
        %v1650 = vpop.f32.mrb[0].mxu0
        %v1651 = vadd.f32 %v1586, %v1650
        %v1652 = vpop.f32.mrb[0].mxu0
        %v1653 = vpop.f32.mrb[0].mxu0
        %v1654 = vadd.f32 %v1589, %v1653
        %v1655 = vpop.f32.mrb[0].mxu0
        %1656 = vdwg.mxu0
        %v1657 = vmax.f32 %v1627, 0.0
        %v1658 = vmax.f32 %v1630, 0.0
        %v1659 = vmax.f32 %v1635, 0.0
        %v1660 = vmax.f32 %v1638, 0.0
        %v1661 = vmax.f32 %v1643, 0.0
        %v1662 = vmax.f32 %v1646, 0.0
        %v1663 = vmax.f32 %v1651, 0.0
        %v1664 = vmax.f32 %v1654, 0.0
        %v1665 = vpack.c.bf16 %v1658, %v1657
        %v1666 = vpack.c.bf16 %v1660, %v1659
        %v1667 = vpack.c.bf16 %v1662, %v1661
        %v1668 = vpack.c.bf16 %v1664, %v1663
        %v1673 = vunpack.c.l.b16 %v1665
        %v1674 = vunpack.c.h.b16 %v1665
        %v1675 = vunpack.c.l.b16 %v1666
        %v1676 = vunpack.c.h.b16 %v1666
        %v1677 = vunpack.c.l.b16 %v1667
        %v1678 = vunpack.c.h.b16 %v1667
        %v1679 = vunpack.c.l.b16 %v1668
        %v1680 = vunpack.c.h.b16 %v1668
        %v1681 = vpack.c.b16 %v1673, %v1673
        %v1682 = vpack.c.b16 %v1674, %v1674
        %v1683 = vpack.c.b16 %v1675, %v1675
        %v1684 = vpack.c.b16 %v1676, %v1676
        %v1685 = vpack.c.b16 %v1677, %v1677
        %v1686 = vpack.c.b16 %v1678, %v1678
        %v1687 = vpack.c.b16 %v1679, %v1679
        %v1688 = vpack.c.b16 %v1680, %v1680
        %1697 = vst [vmem:[%s210] sm:$0xf] %v1681
        %1698 = vst [vmem:[%s210 + $0x4] sm:$0xf] %v1682
        %1699 = vst [vmem:[%s210 + $0x8] sm:$0xf] %v1683
        %1700 = vst [vmem:[%s210 + $0xc] sm:$0xf] %v1684
        %1701 = vst [vmem:[%s210 + $0x10] sm:$0xf] %v1685
        %1702 = vst [vmem:[%s210 + $0x14] sm:$0xf] %v1686
        %1703 = vst [vmem:[%s210 + $0x18] sm:$0xf] %v1687
        %1704 = vst [vmem:[%s210 + $0x1c] sm:$0xf] %v1688
        %s1705 = sand.u32 %s126, 1
        %s1706 = scalar_lea.sflag [#allocation3], %s1705
        %s1707 = sand.u32 %s126, 1
        %s1708 = smul.addr %s1707, 32
        %s1709 = scalar_lea.vmem [#allocation2], %s1708
        // Predicated region
        $region33: #{tpu_custom_call.1} parent=31 // pred_check
          %p1710 = pneg %p136
        $region34: #{tpu_custom_call.1} parent=31 // pred_check_branch
          %1712 = sbr.rel (%p1710) target = $region36
        $region35: #{tpu_custom_call.1} parent=31 // pred_region
          %s1713 = smul.u32 8, %s24
          %s1715 = ssub.s32 512, 512
          %1716 = vsyncadd %s1706, %s1715
          %s1717 = sadd.s32 %s22, %s1713
          %s1718 = smul.addr %s23, 8
          %s1719 = sadd.s32 %s1717, %s1718
          %s1720 = smul.addr %s1719, 64
          %s1721 = scalar_lea.hbm %s3, %s1720
          %s1722 = sshll.u32 %s1709, 4
          %s1723 = int_to_ptr.vmem [resolvable:$true] %s1722
          %1728 = dma.vmem_to_hbm [thread:$0]  %s1723, 512, %s1721, %s1706, 64, 64, 4
        $region36: #{tpu_custom_call.1} parent=31 // pred_fallthru
          _
      $region32: #{tpu_custom_call.1} parent=5 // pred_fallthru
        _
      %p1729 = scmp.le.s32.totalorder 2, %s12
      // Predicated region
      $region37: #{tpu_custom_call.1} parent=5 // pred_check
        %p1730 = pneg %p1729
      $region38: #{tpu_custom_call.1} parent=5 // pred_check_branch
        %1732 = sbr.rel (%p1730) target = $region40
      $region39: #{tpu_custom_call.1} parent=5 // pred_region
        %s1733 = ssub.s32 %s12, 2
        // Predicated region
        $region41: #{tpu_custom_call.1} parent=39 // pred_check
          %p1734 = pneg %p142
        $region42: #{tpu_custom_call.1} parent=39 // pred_check_branch
          %1736 = sbr.rel (%p1734) target = $region44
        $region43: #{tpu_custom_call.1} parent=39 // pred_region
          %s1737 = sand.u32 %s127, 1
          %s1738 = scalar_lea.sflag [#allocation3], %s1737
          %s1739 = sand.u32 %s127, 1
          %s1740 = smul.addr %s1739, 32
          %s1741 = scalar_lea.vmem [#allocation2], %s1740
          %1742 = dma.done %s1738, 512
        $region44: #{tpu_custom_call.1} parent=39 // pred_fallthru
          _
      $region40: #{tpu_custom_call.1} parent=5 // pred_fallthru
        _
    $region6: #{tpu_custom_call.1} parent=1 // loop_footer
      %s16 = sadd.s32 1, %s12
    $region7: #{tpu_custom_call.1} parent=1 // loop_footer_branch
      %11 = sbr.rel target = $region3
    $region8: #{tpu_custom_call.1} parent=1 // loop_exit
      _
    %1743 = vsyncpa [#allocation3], 1
    %s1744 = scalar_lea.sflag [#allocation3], 1
    %1745 = vsyncpa %s1744, 1

</llo_original>
